<compile_context>
chip_gen: v5e
topology: v5e:2x2
jax: 0.10.0
libtpu: 0.0.40
codegen_flags: <defaults>
</compile_context>

<pallas_src>
import jax
import jax.numpy as jnp
from jax.experimental import pallas as pl
from jax.experimental.pallas import tpu as pltpu


# --------------------------------------------------------------------------
# Parameter-prep glue (outside the kernel): spectral norm + eval BatchNorm fold
# --------------------------------------------------------------------------
def _spectral_normalize(w2d, iters=5):
    """nn.utils.spectral_norm at eval time: divide by the largest singular value
    (estimated by power iteration, as torch does).
    TODO(synk): a real checkpoint carries persistent trained u/v buffers; here
    sigma is re-estimated from scratch on every call (close but not bit-exact)."""
    u = jnp.full((w2d.shape[0],), 1.0 / (w2d.shape[0] ** 0.5), w2d.dtype)
    v = None
    for _ in range(iters):
        v = w2d.T @ u
        v = v / (jnp.linalg.norm(v) + 1e-12)
        u = w2d @ v
        u = u / (jnp.linalg.norm(u) + 1e-12)
    sigma = jnp.vdot(u, w2d @ v)
    return w2d / (sigma + 1e-12)


def _round_up(a, b):
    return -(-a // b) * b


def _vmem_limit_bytes(default=32 * 1024 * 1024):
    """Derive the scoped-VMEM limit from the chip instead of inheriting it
    (v7x has 64 MiB physical VMEM per core, v5e/v6e have 128 MiB)."""
    try:
        cap = pltpu.get_tpu_info().vmem_capacity_bytes
        return max(default, min(cap // 2, 64 * 1024 * 1024))
    except Exception:
        return default


# --------------------------------------------------------------------------
# Fused kernel: 7x7 conv (pre-built patches) -> 5 x [1x1 + BN + ReLU] -> 1x1 + sigmoid
# --------------------------------------------------------------------------
def _make_kernel(feats, n_mid, tr, wout_p, kdim_p):
    m = tr * wout_p

    def kernel(p_ref, w1_ref, b1_ref, wmid_ref, bmid_ref, wl_ref, bl_ref, o_ref):
        # ---- first_layer: 7x7 valid conv as ONE MXU matmul over im2col patches
        patch = p_ref[0].reshape(m, kdim_p)                       # bf16 (M, Kp)
        h = jnp.dot(patch, w1_ref[...], preferred_element_type=jnp.float32)
        h = h + b1_ref[...]                                       # bias only; no activation

        # ---- feature_block: n_mid x [1x1 conv (BN folded) -> ReLU] -----------
        # bf16 operands on the MXU, f32 accumulation; activations stay in VMEM.
        for l in range(n_mid):
            h = jnp.dot(h.astype(jnp.bfloat16), wmid_ref[l],
                        preferred_element_type=jnp.float32)
            h = jnp.maximum(h + bmid_ref[l], 0.0)

        # ---- final_layer: 1x1 conv (feats -> 1) + Sigmoid ---------------------
        # Cout=1 head as broadcast-multiply + lane reduction (XLU); the store is
        # a lane-dense (tr, wout_p) slab (no trailing-1 masked stores).
        h3 = h.reshape(tr, wout_p, feats)
        z = jnp.sum(h3 * wl_ref[...], axis=-1) + bl_ref[...]
        o_ref[0] = (1.0 / (1.0 + jnp.exp(-z))).astype(o_ref.dtype)

    return kernel


# --------------------------------------------------------------------------
# Module: Discriminator_UP (layers=7, features=64, D_kernel_size=7)
# --------------------------------------------------------------------------
def init_params(key, layers=7, features=64, d_kernel_size=7, in_channels=3):
    """Deterministic synthetic parameters with the same shapes/roles as the
    PyTorch module (conv weights+bias, BatchNorm gamma/beta/mean/var)."""
    ks = d_kernel_size
    key, k1, k2 = jax.random.split(key, 3)
    std1 = (2.0 / (ks * ks * in_channels)) ** 0.5
    params = {
        "w1": std1 * jax.random.normal(k1, (ks, ks, in_channels, features), jnp.float32),
        "b1": 0.01 * jax.random.normal(k2, (features,), jnp.float32),
        "mid": [],
    }
    for _ in range(layers - 2):
        key, kw, kb, kg, kbe, km, kv = jax.random.split(key, 7)
        w = (2.0 / features) ** 0.5 * jax.random.normal(kw, (features, features), jnp.float32)
        b = 0.01 * jax.random.normal(kb, (features,), jnp.float32)
        gamma = 1.0 + 0.1 * jax.random.normal(kg, (features,), jnp.float32)
        beta = 0.1 * jax.random.normal(kbe, (features,), jnp.float32)
        mean = 0.1 * jax.random.normal(km, (features,), jnp.float32)
        var = 0.5 + jax.random.uniform(kv, (features,), jnp.float32)
        params["mid"].append((w, b, gamma, beta, mean, var))
    key, kw, kb = jax.random.split(key, 3)
    params["wl"] = (2.0 / features) ** 0.5 * jax.random.normal(kw, (features, 1), jnp.float32)
    params["bl"] = 0.01 * jax.random.normal(kb, (1,), jnp.float32)
    return params


def discriminator_up_forward(x_nchw, params):
    """Eval-mode forward of Discriminator_UP.  x_nchw: (N, 3, H, W) float32."""
    w1 = params["w1"]
    ks, _, cin, feats = w1.shape
    n_mid = len(params["mid"])
    kdim = ks * ks * cin
    kdim_p = _round_up(kdim, 16)              # 147 -> 160: aligned bf16 contraction

    # ---- parameter prep (cheap JAX glue, folded into the jit) ---------------
    # first-conv weight rows ordered as k = (dy*ks + dx)*cin + c, matching the
    # wrapper-side im2col tap ordering below (HWIO layout assumed).
    w1_2d = _spectral_normalize(w1.reshape(kdim, feats))
    w1_2d = jnp.pad(w1_2d, ((0, kdim_p - kdim), (0, 0))).astype(jnp.bfloat16)
    b1 = params["b1"].reshape(1, feats).astype(jnp.float32)
    wm, bm = [], []
    for (w, b, gamma, beta, mean, var) in params["mid"]:
        w = _spectral_normalize(w)
        s = gamma / jnp.sqrt(var + 1e-5)      # eval-mode BatchNorm folded in
        wm.append(w * s[None, :])
        bm.append(b * s + beta - mean * s)
    wmid = jnp.stack(wm).astype(jnp.bfloat16)                      # (n_mid, F, F)
    bmid = jnp.stack(bm).reshape(n_mid, 1, feats).astype(jnp.float32)
    wl = _spectral_normalize(params["wl"]).reshape(1, 1, feats).astype(jnp.float32)
    bl = params["bl"].reshape(1, 1).astype(jnp.float32)

    # ---- tiling --------------------------------------------------------------
    N, C, H, W = x_nchw.shape
    assert C == cin and H >= ks and W >= ks
    hout, wout = H - (ks - 1), W - (ks - 1)

    # Lane-dense output width: multiple of 128 for real images, 8 for tiny ones.
    wout_p = _round_up(wout, 128) if wout >= 128 else _round_up(wout, 8)

    vmem_limit = _vmem_limit_bytes()
    # ~8K output pixels per tile within a 32 MiB budget (v7x), ~16K with 64 MiB.
    m_target = 16384 if vmem_limit > 32 * 1024 * 1024 else 8192
    tr = max(8, (m_target // wout_p) // 8 * 8)
    tr = min(tr, _round_up(hout, 8))
    rt = -(-hout // tr)
    if N * rt < 2 and tr > 8:                 # keep both v7x TensorCores busy
        tr = max(8, (tr // 2) // 8 * 8)
        rt = -(-hout // tr)
    hp_out = rt * tr

    # ---- wrapper-side im2col (bf16, lane-dense, K padded to kdim_p) ----------
    x = jnp.transpose(x_nchw, (0, 2, 3, 1)).astype(jnp.bfloat16)   # NCHW -> NHWC
    x = jnp.pad(x, ((0, 0), (0, hp_out + ks - 1 - H),
                    (0, wout_p + ks - 1 - W), (0, 0)))
    taps = [x[:, dy:dy + hp_out, dx:dx + wout_p, :]
            for dy in range(ks) for dx in range(ks)]
    if kdim_p > kdim:
        taps.append(jnp.zeros((N, hp_out, wout_p, kdim_p - kdim), jnp.bfloat16))
    patches = jnp.concatenate(taps, axis=-1)          # (N, hp_out, wout_p, Kp)

    kernel = _make_kernel(feats, n_mid, tr, wout_p, kdim_p)
    out = pl.pallas_call(
        kernel,
        out_shape=jax.ShapeDtypeStruct((N, hp_out, wout_p), jnp.float32),
        grid=(N, rt),
        in_specs=[
            pl.BlockSpec((1, tr, wout_p, kdim_p), lambda n, i: (n, i, 0, 0)),   # patches (pipelined)
            pl.BlockSpec((kdim_p, feats), lambda n, i: (0, 0)),                 # first-conv weight (resident)
            pl.BlockSpec((1, feats), lambda n, i: (0, 0)),                      # first-conv bias
            pl.BlockSpec((n_mid, feats, feats), lambda n, i: (0, 0, 0)),        # 1x1 weights (BN folded)
            pl.BlockSpec((n_mid, 1, feats), lambda n, i: (0, 0, 0)),            # 1x1 biases  (BN folded)
            pl.BlockSpec((1, 1, feats), lambda n, i: (0, 0, 0)),                # final weight
            pl.BlockSpec((1, 1), lambda n, i: (0, 0)),                          # final bias
        ],
        out_specs=pl.BlockSpec((1, tr, wout_p), lambda n, i: (n, i, 0)),
        compiler_params=pltpu.CompilerParams(
            dimension_semantics=("parallel", "parallel"),   # megacore sharding on v7x
            vmem_limit_bytes=vmem_limit),
    )(patches, w1_2d, b1, wmid, bmid, wl, bl)

    out = out[:, :hout, :wout]                # drop row/column padding
    return out[:, None, :, :]                 # -> (N, 1, hout, wout)


if __name__ == "__main__":
    key = jax.random.PRNGKey(0)
    kx, kp = jax.random.split(key)

    # Small shapes consistent with the module: RGB input, 7x7 valid first conv.
    N, C, H, W = 2, 3, 16, 16
    x = jax.random.normal(kx, (N, C, H, W), jnp.float32)
    params = init_params(kp, layers=7, features=64, d_kernel_size=7)

    fwd = jax.jit(discriminator_up_forward)
    out = jax.block_until_ready(fwd(x, params))

    assert out.shape == (N, 1, H - 6, W - 6), out.shape
    assert bool(jnp.all(jnp.isfinite(out)))
    assert bool(jnp.all((out >= 0.0) & (out <= 1.0)))      # sigmoid range
    print("KERNEL_OK")
</pallas_src>

<mosaic_0001>
module attributes {stable_mosaic.version = 11 : i64} {
  func.func @kernel(%arg0: i32, %arg1: i32, %arg2: memref<1x16x16x160xbf16, #tpu.memory_space<vmem>>, %arg3: memref<160x64xbf16, #tpu.memory_space<vmem>>, %arg4: memref<1x64xf32, #tpu.memory_space<vmem>>, %arg5: memref<5x64x64xbf16, #tpu.memory_space<vmem>>, %arg6: memref<5x1x64xf32, #tpu.memory_space<vmem>>, %arg7: memref<1x1x64xf32, #tpu.memory_space<vmem>>, %arg8: memref<1x1xf32, #tpu.memory_space<vmem>>, %arg9: memref<1x16x16xf32, #tpu.memory_space<vmem>>) attributes {dimension_semantics = [#tpu.dimension_semantics<parallel>, #tpu.dimension_semantics<parallel>], iteration_bounds = array<i64: 2, 1>, scalar_prefetch = 0 : i64, scratch_operands = 0 : i64, tpu.core_type = #tpu.core_type<tc>, window_params = [{transform_indices = @transform_0, window_bounds = array<i64: 1, 16, 16, 160>}, {pipeline_mode = #tpu.pipeline_mode<synchronous>, transform_indices = @transform_1, window_bounds = array<i64: 160, 64>}, {pipeline_mode = #tpu.pipeline_mode<synchronous>, transform_indices = @transform_2, window_bounds = array<i64: 1, 64>}, {pipeline_mode = #tpu.pipeline_mode<synchronous>, transform_indices = @transform_3, window_bounds = array<i64: 5, 64, 64>}, {pipeline_mode = #tpu.pipeline_mode<synchronous>, transform_indices = @transform_4, window_bounds = array<i64: 5, 1, 64>}, {pipeline_mode = #tpu.pipeline_mode<synchronous>, transform_indices = @transform_5, window_bounds = array<i64: 1, 1, 64>}, {pipeline_mode = #tpu.pipeline_mode<synchronous>, transform_indices = @transform_6, window_bounds = array<i64: 1, 1>}, {transform_indices = @transform_7, window_bounds = array<i64: 1, 16, 16>}]} {
    %c0 = arith.constant 0 : index
    %c0_0 = arith.constant 0 : index
    %c0_1 = arith.constant 0 : index
    %c0_2 = arith.constant 0 : index
    %0 = vector.load %arg2[%c0, %c0_0, %c0_1, %c0_2] : memref<1x16x16x160xbf16, #tpu.memory_space<vmem>>, vector<1x16x16x160xbf16>
    %1 = vector.shape_cast %0 : vector<1x16x16x160xbf16> to vector<16x16x160xbf16>
    %2 = vector.shape_cast %1 : vector<16x16x160xbf16> to vector<256x160xbf16>
    %c0_3 = arith.constant 0 : index
    %c0_4 = arith.constant 0 : index
    %3 = vector.load %arg3[%c0_3, %c0_4] : memref<160x64xbf16, #tpu.memory_space<vmem>>, vector<160x64xbf16>
    %cst = arith.constant dense<0.000000e+00> : vector<256x64xf32>
    %4 = tpu.matmul %2, %3, %cst {dimension_numbers = #tpu.dot_dimension_numbers<[1], [0], [0], [1], [0, 0, 1, 1], [], []>} : vector<256x160xbf16>, vector<160x64xbf16>, vector<256x64xf32> -> vector<256x64xf32>
    %c0_5 = arith.constant 0 : index
    %c0_6 = arith.constant 0 : index
    %5 = vector.load %arg4[%c0_5, %c0_6] : memref<1x64xf32, #tpu.memory_space<vmem>>, vector<1x64xf32>
    %6 = vector.broadcast %5 : vector<1x64xf32> to vector<256x64xf32>
    %7 = arith.addf %4, %6 : vector<256x64xf32>
    %8 = arith.truncf %7 : vector<256x64xf32> to vector<256x64xbf16>
    %c0_7 = arith.constant 0 : index
    %c0_8 = arith.constant 0 : index
    %c0_9 = arith.constant 0 : index
    %9 = vector.load %arg5[%c0_7, %c0_8, %c0_9] : memref<5x64x64xbf16, #tpu.memory_space<vmem>>, vector<1x64x64xbf16>
    %10 = vector.shape_cast %9 : vector<1x64x64xbf16> to vector<64x64xbf16>
    %cst_10 = arith.constant dense<0.000000e+00> : vector<256x64xf32>
    %11 = tpu.matmul %8, %10, %cst_10 {dimension_numbers = #tpu.dot_dimension_numbers<[1], [0], [0], [1], [0, 0, 1, 1], [], []>} : vector<256x64xbf16>, vector<64x64xbf16>, vector<256x64xf32> -> vector<256x64xf32>
    %c0_11 = arith.constant 0 : index
    %c0_12 = arith.constant 0 : index
    %c0_13 = arith.constant 0 : index
    %12 = vector.load %arg6[%c0_11, %c0_12, %c0_13] : memref<5x1x64xf32, #tpu.memory_space<vmem>>, vector<1x1x64xf32>
    %13 = vector.shape_cast %12 : vector<1x1x64xf32> to vector<1x64xf32>
    %14 = vector.broadcast %13 : vector<1x64xf32> to vector<256x64xf32>
    %15 = arith.addf %11, %14 : vector<256x64xf32>
    %cst_14 = arith.constant 0.000000e+00 : f32
    %16 = vector.broadcast %cst_14 : f32 to vector<256x64xf32>
    %17 = arith.maximumf %15, %16 : vector<256x64xf32>
    %18 = arith.truncf %17 : vector<256x64xf32> to vector<256x64xbf16>
    %c1 = arith.constant 1 : index
    %c0_15 = arith.constant 0 : index
    %c0_16 = arith.constant 0 : index
    %19 = vector.load %arg5[%c1, %c0_15, %c0_16] : memref<5x64x64xbf16, #tpu.memory_space<vmem>>, vector<1x64x64xbf16>
    %20 = vector.shape_cast %19 : vector<1x64x64xbf16> to vector<64x64xbf16>
    %cst_17 = arith.constant dense<0.000000e+00> : vector<256x64xf32>
    %21 = tpu.matmul %18, %20, %cst_17 {dimension_numbers = #tpu.dot_dimension_numbers<[1], [0], [0], [1], [0, 0, 1, 1], [], []>} : vector<256x64xbf16>, vector<64x64xbf16>, vector<256x64xf32> -> vector<256x64xf32>
    %c1_18 = arith.constant 1 : index
    %c0_19 = arith.constant 0 : index
    %c0_20 = arith.constant 0 : index
    %22 = vector.load %arg6[%c1_18, %c0_19, %c0_20] : memref<5x1x64xf32, #tpu.memory_space<vmem>>, vector<1x1x64xf32>
    %23 = vector.shape_cast %22 : vector<1x1x64xf32> to vector<1x64xf32>
    %24 = vector.broadcast %23 : vector<1x64xf32> to vector<256x64xf32>
    %25 = arith.addf %21, %24 : vector<256x64xf32>
    %cst_21 = arith.constant 0.000000e+00 : f32
    %26 = vector.broadcast %cst_21 : f32 to vector<256x64xf32>
    %27 = arith.maximumf %25, %26 : vector<256x64xf32>
    %28 = arith.truncf %27 : vector<256x64xf32> to vector<256x64xbf16>
    %c2 = arith.constant 2 : index
    %c0_22 = arith.constant 0 : index
    %c0_23 = arith.constant 0 : index
    %29 = vector.load %arg5[%c2, %c0_22, %c0_23] : memref<5x64x64xbf16, #tpu.memory_space<vmem>>, vector<1x64x64xbf16>
    %30 = vector.shape_cast %29 : vector<1x64x64xbf16> to vector<64x64xbf16>
    %cst_24 = arith.constant dense<0.000000e+00> : vector<256x64xf32>
    %31 = tpu.matmul %28, %30, %cst_24 {dimension_numbers = #tpu.dot_dimension_numbers<[1], [0], [0], [1], [0, 0, 1, 1], [], []>} : vector<256x64xbf16>, vector<64x64xbf16>, vector<256x64xf32> -> vector<256x64xf32>
    %c2_25 = arith.constant 2 : index
    %c0_26 = arith.constant 0 : index
    %c0_27 = arith.constant 0 : index
    %32 = vector.load %arg6[%c2_25, %c0_26, %c0_27] : memref<5x1x64xf32, #tpu.memory_space<vmem>>, vector<1x1x64xf32>
    %33 = vector.shape_cast %32 : vector<1x1x64xf32> to vector<1x64xf32>
    %34 = vector.broadcast %33 : vector<1x64xf32> to vector<256x64xf32>
    %35 = arith.addf %31, %34 : vector<256x64xf32>
    %cst_28 = arith.constant 0.000000e+00 : f32
    %36 = vector.broadcast %cst_28 : f32 to vector<256x64xf32>
    %37 = arith.maximumf %35, %36 : vector<256x64xf32>
    %38 = arith.truncf %37 : vector<256x64xf32> to vector<256x64xbf16>
    %c3 = arith.constant 3 : index
    %c0_29 = arith.constant 0 : index
    %c0_30 = arith.constant 0 : index
    %39 = vector.load %arg5[%c3, %c0_29, %c0_30] : memref<5x64x64xbf16, #tpu.memory_space<vmem>>, vector<1x64x64xbf16>
    %40 = vector.shape_cast %39 : vector<1x64x64xbf16> to vector<64x64xbf16>
    %cst_31 = arith.constant dense<0.000000e+00> : vector<256x64xf32>
    %41 = tpu.matmul %38, %40, %cst_31 {dimension_numbers = #tpu.dot_dimension_numbers<[1], [0], [0], [1], [0, 0, 1, 1], [], []>} : vector<256x64xbf16>, vector<64x64xbf16>, vector<256x64xf32> -> vector<256x64xf32>
    %c3_32 = arith.constant 3 : index
    %c0_33 = arith.constant 0 : index
    %c0_34 = arith.constant 0 : index
    %42 = vector.load %arg6[%c3_32, %c0_33, %c0_34] : memref<5x1x64xf32, #tpu.memory_space<vmem>>, vector<1x1x64xf32>
    %43 = vector.shape_cast %42 : vector<1x1x64xf32> to vector<1x64xf32>
    %44 = vector.broadcast %43 : vector<1x64xf32> to vector<256x64xf32>
    %45 = arith.addf %41, %44 : vector<256x64xf32>
    %cst_35 = arith.constant 0.000000e+00 : f32
    %46 = vector.broadcast %cst_35 : f32 to vector<256x64xf32>
    %47 = arith.maximumf %45, %46 : vector<256x64xf32>
    %48 = arith.truncf %47 : vector<256x64xf32> to vector<256x64xbf16>
    %c4 = arith.constant 4 : index
    %c0_36 = arith.constant 0 : index
    %c0_37 = arith.constant 0 : index
    %49 = vector.load %arg5[%c4, %c0_36, %c0_37] : memref<5x64x64xbf16, #tpu.memory_space<vmem>>, vector<1x64x64xbf16>
    %50 = vector.shape_cast %49 : vector<1x64x64xbf16> to vector<64x64xbf16>
    %cst_38 = arith.constant dense<0.000000e+00> : vector<256x64xf32>
    %51 = tpu.matmul %48, %50, %cst_38 {dimension_numbers = #tpu.dot_dimension_numbers<[1], [0], [0], [1], [0, 0, 1, 1], [], []>} : vector<256x64xbf16>, vector<64x64xbf16>, vector<256x64xf32> -> vector<256x64xf32>
    %c4_39 = arith.constant 4 : index
    %c0_40 = arith.constant 0 : index
    %c0_41 = arith.constant 0 : index
    %52 = vector.load %arg6[%c4_39, %c0_40, %c0_41] : memref<5x1x64xf32, #tpu.memory_space<vmem>>, vector<1x1x64xf32>
    %53 = vector.shape_cast %52 : vector<1x1x64xf32> to vector<1x64xf32>
    %54 = vector.broadcast %53 : vector<1x64xf32> to vector<256x64xf32>
    %55 = arith.addf %51, %54 : vector<256x64xf32>
    %cst_42 = arith.constant 0.000000e+00 : f32
    %56 = vector.broadcast %cst_42 : f32 to vector<256x64xf32>
    %57 = arith.maximumf %55, %56 : vector<256x64xf32>
    %58 = vector.shape_cast %57 : vector<256x64xf32> to vector<16x16x64xf32>
    %c0_43 = arith.constant 0 : index
    %c0_44 = arith.constant 0 : index
    %c0_45 = arith.constant 0 : index
    %59 = vector.load %arg7[%c0_43, %c0_44, %c0_45] : memref<1x1x64xf32, #tpu.memory_space<vmem>>, vector<1x1x64xf32>
    %60 = vector.broadcast %59 : vector<1x1x64xf32> to vector<16x16x64xf32>
    %61 = arith.mulf %58, %60 : vector<16x16x64xf32>
    %cst_46 = arith.constant dense<0.000000e+00> : vector<16x16xf32>
    %62 = vector.multi_reduction <add>, %61, %cst_46 [2] : vector<16x16x64xf32> to vector<16x16xf32>
    %c0_47 = arith.constant 0 : index
    %c0_48 = arith.constant 0 : index
    %63 = vector.load %arg8[%c0_47, %c0_48] : memref<1x1xf32, #tpu.memory_space<vmem>>, vector<1x1xf32>
    %64 = vector.broadcast %63 : vector<1x1xf32> to vector<16x16xf32>
    %65 = arith.addf %62, %64 : vector<16x16xf32>
    %cst_49 = arith.constant 0.000000e+00 : f32
    %66 = vector.broadcast %cst_49 : f32 to vector<16x16xf32>
    %67 = arith.subf %66, %65 : vector<16x16xf32>
    %68 = math.exp %67 : vector<16x16xf32>
    %cst_50 = arith.constant 1.000000e+00 : f32
    %69 = vector.broadcast %cst_50 : f32 to vector<16x16xf32>
    %70 = arith.addf %69, %68 : vector<16x16xf32>
    %cst_51 = arith.constant 1.000000e+00 : f32
    %71 = vector.broadcast %cst_51 : f32 to vector<16x16xf32>
    %72 = arith.divf %71, %70 : vector<16x16xf32>
    %c0_52 = arith.constant 0 : index
    %c0_53 = arith.constant 0 : index
    %c0_54 = arith.constant 0 : index
    %73 = vector.load %arg9[%c0_52, %c0_53, %c0_54] : memref<1x16x16xf32, #tpu.memory_space<vmem>>, vector<1x16x16xf32>
    %74 = vector.shape_cast %73 : vector<1x16x16xf32> to vector<16x16xf32>
    %75 = vector.shape_cast %72 : vector<16x16xf32> to vector<1x16x16xf32>
    tpu.vector_store %arg9[%c0_52, %c0_53, %c0_54], %75 {strides = array<i32>} : memref<1x16x16xf32, #tpu.memory_space<vmem>>, vector<1x16x16xf32>,
    return
  }
  func.func @transform_0(%arg0: i32, %arg1: i32) -> (i32, i32, i32, i32) {
    %c0_i32 = arith.constant 0 : i32
    %c0_i32_0 = arith.constant 0 : i32
    %c0_i32_1 = arith.constant 0 : i32
    return %arg0, %arg1, %c0_i32, %c0_i32_0 : i32, i32, i32, i32
  }
  func.func @transform_1(%arg0: i32, %arg1: i32) -> (i32, i32) {
    %c0_i32 = arith.constant 0 : i32
    %c0_i32_0 = arith.constant 0 : i32
    %c0_i32_1 = arith.constant 0 : i32
    return %c0_i32, %c0_i32_0 : i32, i32
  }
  func.func @transform_2(%arg0: i32, %arg1: i32) -> (i32, i32) {
    %c0_i32 = arith.constant 0 : i32
    %c0_i32_0 = arith.constant 0 : i32
    %c0_i32_1 = arith.constant 0 : i32
    return %c0_i32, %c0_i32_0 : i32, i32
  }
  func.func @transform_3(%arg0: i32, %arg1: i32) -> (i32, i32, i32) {
    %c0_i32 = arith.constant 0 : i32
    %c0_i32_0 = arith.constant 0 : i32
    %c0_i32_1 = arith.constant 0 : i32
    %c0_i32_2 = arith.constant 0 : i32
    return %c0_i32, %c0_i32_0, %c0_i32_1 : i32, i32, i32
  }
  func.func @transform_4(%arg0: i32, %arg1: i32) -> (i32, i32, i32) {
    %c0_i32 = arith.constant 0 : i32
    %c0_i32_0 = arith.constant 0 : i32
    %c0_i32_1 = arith.constant 0 : i32
    %c0_i32_2 = arith.constant 0 : i32
    return %c0_i32, %c0_i32_0, %c0_i32_1 : i32, i32, i32
  }
  func.func @transform_5(%arg0: i32, %arg1: i32) -> (i32, i32, i32) {
    %c0_i32 = arith.constant 0 : i32
    %c0_i32_0 = arith.constant 0 : i32
    %c0_i32_1 = arith.constant 0 : i32
    %c0_i32_2 = arith.constant 0 : i32
    return %c0_i32, %c0_i32_0, %c0_i32_1 : i32, i32, i32
  }
  func.func @transform_6(%arg0: i32, %arg1: i32) -> (i32, i32) {
    %c0_i32 = arith.constant 0 : i32
    %c0_i32_0 = arith.constant 0 : i32
    %c0_i32_1 = arith.constant 0 : i32
    return %c0_i32, %c0_i32_0 : i32, i32
  }
  func.func @transform_7(%arg0: i32, %arg1: i32) -> (i32, i32, i32) {
    %c0_i32 = arith.constant 0 : i32
    %c0_i32_0 = arith.constant 0 : i32
    return %arg0, %arg1, %c0_i32 : i32, i32, i32
  }
}

</mosaic_0001>

<llo_original>
// kernel: discriminator_up_forward.1
$region0: #{discriminator_up_forward.1}
  #allocation0 [shape = 'u32[]', space=smem, size = 0x4, offset = 0x4, fixed_abs, tag = 'smem constant byte address 0x4 - core index']
  #allocation1 [shape = 'u32[72,128]{1,0:T(1,128)}', space=vmem, size = 0x9000, scoped, tag = 'internal scratch']
  #allocation2 [shape = 'f32[1,1]{1,0:T(1,128)S(1)}', space=vmem, size = 0x200, scoped, tag = 'scoped memory for discriminator_up_forward.1']
  %s0 = inlined_call_operand.vmem [shape: bf16[2,16,16,160], index: 0, kind: input, shape index: {}]
  %s1 = inlined_call_operand.vmem [shape: bf16[160,64], index: 1, kind: input, shape index: {}]
  %s2 = inlined_call_operand.vmem [shape: f32[1,64], index: 2, kind: input, shape index: {}]
  %s3 = inlined_call_operand.vmem [shape: bf16[5,64,64], index: 3, kind: input, shape index: {}]
  %s4 = inlined_call_operand.vmem [shape: f32[5,1,64], index: 4, kind: input, shape index: {}]
  %s5 = inlined_call_operand.vmem [shape: f32[1,1,64], index: 5, kind: input, shape index: {}]
  %s6 = inlined_call_operand.<no memory space> [shape: f32[1,1], index: 6, kind: input, shape index: {}]
  %s7 = inlined_call_operand.vmem [shape: f32[2,16,16], index: 7, kind: output, shape index: {}]
  %s8 = sld [smem:[#allocation0]]
  $region61: #{discriminator_up_forward.1} parent=0
    _
  %s10 = ssub.s32 1, %s8
  %s11 = scalar_select 0, %s10, %s8
  %v12 = vstv %s6
  %13 = vst [vmem:[#allocation2] sm:$0x1] %v12
  loop: start=0, step=1, limit=4
  $region2: #{discriminator_up_forward.1} parent=0 // loop_pre_header
    _
  $region3: #{discriminator_up_forward.1} parent=0 // loop_header
    %s15 = sphi 0, %s19
    %p16 = scmp.ge.s32.totalorder %s15, 4
    %s22 = sphi 0, %s34
    %s23 = sphi 0, %s30
    %s24 = sphi 0, %s22
    %s25 = sphi 0, %s23
    %s26 = sphi 0, %s24
    %s27 = sphi 0, %s25
    %s39 = sphi 0, %s41
    %s42 = sphi 0, %s39
    %s43 = sphi 0, %s42
    %s59 = sphi 0, %s43
    %s63 = sphi 0, %s63
    %s65 = sphi 0, %s63
    %s66 = sphi 0, %s65
    %s80 = sphi 0, %s66
    %s84 = sphi 0, %s84
    %s86 = sphi 0, %s84
    %s87 = sphi 0, %s86
    %s101 = sphi 0, %s87
    %s105 = sphi 0, %s105
    %s107 = sphi 0, %s105
    %s108 = sphi 0, %s107
    %s122 = sphi 0, %s108
    %s126 = sphi 0, %s126
    %s128 = sphi 0, %s126
    %s129 = sphi 0, %s128
    %s143 = sphi 0, %s129
    %s147 = sphi 0, %s147
    %s149 = sphi 0, %s147
    %s150 = sphi 0, %s149
    %s164 = sphi 0, %s150
    %s168 = sphi 0, %s168
    %s170 = sphi 0, %s168
    %s171 = sphi 0, %s170
    %s185 = sphi 0, %s171
    %s193 = sphi 0, %s195
    %s196 = sphi 0, %s193
    %s197 = sphi 0, %s196
    %s213 = sphi 0, %s197
  $region4: #{discriminator_up_forward.1} parent=0 // loop_header_branch
    %18 = sbr.rel (%p16) target = $region8
  $region5: #{discriminator_up_forward.1} parent=0 // loop_body
    %s20 = ssub.s32 %s15, 1
    %s21 = ssub.s32 %s15, 2
    %s28 = sadd.s32 1, %s23
    %p29 = scmp.ge.s32.totalorder %s28, 1
    %s30 = scalar_select %p29, 0, %s28
    %s31 = sadd.s32 1, %s22
    %s32 = scalar_select %p29, %s31, %s22
    %p33 = scmp.ge.s32.totalorder %s32, 2
    %s34 = scalar_select %p33, 0, %s32
    %s35 = ssub.s32 %s22, %s34
    %s36 = ssub.s32 %s23, %s30
    %s37 = sor.u32 %s35, %s36
    %p38 = scmp.eq.s32.totalorder %s37, 0
    %s40 = sadd.s32 %s39, 1
    %s41 = scalar_select %p38, %s39, %s40
    %p44 = pneg %p38
    %p45 = scmp.eq.s32.totalorder %s15, 1
    %p46 = por %p44, %p45
    %p47 = scmp.ne.s32.totalorder %s39, %s42
    %p48 = scmp.eq.s32.totalorder %s15, 0
    %p49 = por %p47, %p48
    %p50 = scmp.ne.s32.totalorder %s39, %s42
    %p51 = scmp.eq.s32.totalorder %s20, 1
    %p52 = por %p50, %p51
    %p53 = scmp.ne.s32.totalorder %s42, %s43
    %p54 = scmp.eq.s32.totalorder %s20, 0
    %p55 = por %p53, %p54
    %p56 = scmp.ne.s32.totalorder %s42, %s43
    %p57 = scmp.eq.s32.totalorder %s21, 1
    %p58 = por %p56, %p57
    %p60 = scmp.ne.s32.totalorder %s43, %s59
    %p61 = scmp.eq.s32.totalorder %s21, 0
    %p62 = por %p60, %p61
    %s64 = sadd.s32 %s63, 1
    %p67 = scmp.eq.s32.totalorder %s15, 1
    %p68 = scmp.ne.s32.totalorder %s63, %s65
    %p69 = scmp.eq.s32.totalorder %s15, 0
    %p70 = por %p68, %p69
    %p71 = scmp.ne.s32.totalorder %s63, %s65
    %p72 = scmp.eq.s32.totalorder %s20, 1
    %p73 = por %p71, %p72
    %p74 = scmp.ne.s32.totalorder %s65, %s66
    %p75 = scmp.eq.s32.totalorder %s20, 0
    %p76 = por %p74, %p75
    %p77 = scmp.ne.s32.totalorder %s65, %s66
    %p78 = scmp.eq.s32.totalorder %s21, 1
    %p79 = por %p77, %p78
    %p81 = scmp.ne.s32.totalorder %s66, %s80
    %p82 = scmp.eq.s32.totalorder %s21, 0
    %p83 = por %p81, %p82
    %s85 = sadd.s32 %s84, 1
    %p88 = scmp.eq.s32.totalorder %s15, 1
    %p89 = scmp.ne.s32.totalorder %s84, %s86
    %p90 = scmp.eq.s32.totalorder %s15, 0
    %p91 = por %p89, %p90
    %p92 = scmp.ne.s32.totalorder %s84, %s86
    %p93 = scmp.eq.s32.totalorder %s20, 1
    %p94 = por %p92, %p93
    %p95 = scmp.ne.s32.totalorder %s86, %s87
    %p96 = scmp.eq.s32.totalorder %s20, 0
    %p97 = por %p95, %p96
    %p98 = scmp.ne.s32.totalorder %s86, %s87
    %p99 = scmp.eq.s32.totalorder %s21, 1
    %p100 = por %p98, %p99
    %p102 = scmp.ne.s32.totalorder %s87, %s101
    %p103 = scmp.eq.s32.totalorder %s21, 0
    %p104 = por %p102, %p103
    %s106 = sadd.s32 %s105, 1
    %p109 = scmp.eq.s32.totalorder %s15, 1
    %p110 = scmp.ne.s32.totalorder %s105, %s107
    %p111 = scmp.eq.s32.totalorder %s15, 0
    %p112 = por %p110, %p111
    %p113 = scmp.ne.s32.totalorder %s105, %s107
    %p114 = scmp.eq.s32.totalorder %s20, 1
    %p115 = por %p113, %p114
    %p116 = scmp.ne.s32.totalorder %s107, %s108
    %p117 = scmp.eq.s32.totalorder %s20, 0
    %p118 = por %p116, %p117
    %p119 = scmp.ne.s32.totalorder %s107, %s108
    %p120 = scmp.eq.s32.totalorder %s21, 1
    %p121 = por %p119, %p120
    %p123 = scmp.ne.s32.totalorder %s108, %s122
    %p124 = scmp.eq.s32.totalorder %s21, 0
    %p125 = por %p123, %p124
    %s127 = sadd.s32 %s126, 1
    %p130 = scmp.eq.s32.totalorder %s15, 1
    %p131 = scmp.ne.s32.totalorder %s126, %s128
    %p132 = scmp.eq.s32.totalorder %s15, 0
    %p133 = por %p131, %p132
    %p134 = scmp.ne.s32.totalorder %s126, %s128
    %p135 = scmp.eq.s32.totalorder %s20, 1
    %p136 = por %p134, %p135
    %p137 = scmp.ne.s32.totalorder %s128, %s129
    %p138 = scmp.eq.s32.totalorder %s20, 0
    %p139 = por %p137, %p138
    %p140 = scmp.ne.s32.totalorder %s128, %s129
    %p141 = scmp.eq.s32.totalorder %s21, 1
    %p142 = por %p140, %p141
    %p144 = scmp.ne.s32.totalorder %s129, %s143
    %p145 = scmp.eq.s32.totalorder %s21, 0
    %p146 = por %p144, %p145
    %s148 = sadd.s32 %s147, 1
    %p151 = scmp.eq.s32.totalorder %s15, 1
    %p152 = scmp.ne.s32.totalorder %s147, %s149
    %p153 = scmp.eq.s32.totalorder %s15, 0
    %p154 = por %p152, %p153
    %p155 = scmp.ne.s32.totalorder %s147, %s149
    %p156 = scmp.eq.s32.totalorder %s20, 1
    %p157 = por %p155, %p156
    %p158 = scmp.ne.s32.totalorder %s149, %s150
    %p159 = scmp.eq.s32.totalorder %s20, 0
    %p160 = por %p158, %p159
    %p161 = scmp.ne.s32.totalorder %s149, %s150
    %p162 = scmp.eq.s32.totalorder %s21, 1
    %p163 = por %p161, %p162
    %p165 = scmp.ne.s32.totalorder %s150, %s164
    %p166 = scmp.eq.s32.totalorder %s21, 0
    %p167 = por %p165, %p166
    %s169 = sadd.s32 %s168, 1
    %p172 = scmp.eq.s32.totalorder %s15, 1
    %p173 = scmp.ne.s32.totalorder %s168, %s170
    %p174 = scmp.eq.s32.totalorder %s15, 0
    %p175 = por %p173, %p174
    %p176 = scmp.ne.s32.totalorder %s168, %s170
    %p177 = scmp.eq.s32.totalorder %s20, 1
    %p178 = por %p176, %p177
    %p179 = scmp.ne.s32.totalorder %s170, %s171
    %p180 = scmp.eq.s32.totalorder %s20, 0
    %p181 = por %p179, %p180
    %p182 = scmp.ne.s32.totalorder %s170, %s171
    %p183 = scmp.eq.s32.totalorder %s21, 1
    %p184 = por %p182, %p183
    %p186 = scmp.ne.s32.totalorder %s171, %s185
    %p187 = scmp.eq.s32.totalorder %s21, 0
    %p188 = por %p186, %p187
    %s189 = ssub.s32 %s22, %s34
    %s190 = ssub.s32 %s23, %s30
    %s191 = sor.u32 %s189, %s190
    %p192 = scmp.eq.s32.totalorder %s191, 0
    %s194 = sadd.s32 %s193, 1
    %s195 = scalar_select %p192, %s193, %s194
    %p198 = pneg %p192
    %p199 = scmp.eq.s32.totalorder %s15, 1
    %p200 = por %p198, %p199
    %p201 = scmp.ne.s32.totalorder %s193, %s196
    %p202 = scmp.eq.s32.totalorder %s15, 0
    %p203 = por %p201, %p202
    %p204 = scmp.ne.s32.totalorder %s193, %s196
    %p205 = scmp.eq.s32.totalorder %s20, 1
    %p206 = por %p204, %p205
    %p207 = scmp.ne.s32.totalorder %s196, %s197
    %p208 = scmp.eq.s32.totalorder %s20, 0
    %p209 = por %p207, %p208
    %p210 = scmp.ne.s32.totalorder %s196, %s197
    %p211 = scmp.eq.s32.totalorder %s21, 1
    %p212 = por %p210, %p211
    %p214 = scmp.ne.s32.totalorder %s197, %s213
    %p215 = scmp.eq.s32.totalorder %s21, 0
    %p216 = por %p214, %p215
    %p217 = scmp.le.s32.totalorder 1, %s15
    %p218 = scmp.lt.s32.totalorder %s15, 3
    %p219 = pnand %p217, %p218
    %p220 = pneg %p219
    // Predicated region
    $region9: #{discriminator_up_forward.1} parent=5 // pred_check
      _
    $region10: #{discriminator_up_forward.1} parent=5 // pred_check_branch
      %222 = sbr.rel (%p219) target = $region12
    $region11: #{discriminator_up_forward.1} parent=5 // pred_region
      %s223 = ssub.s32 %s15, 1
      // Predicated region
      $region13: #{discriminator_up_forward.1} parent=11 // pred_check
        %p224 = pneg %p76
      $region14: #{discriminator_up_forward.1} parent=11 // pred_check_branch
        %226 = sbr.rel (%p224) target = $region16
      $region15: #{discriminator_up_forward.1} parent=11 // pred_region
        _
      $region16: #{discriminator_up_forward.1} parent=11 // pred_fallthru
        _
      // Predicated region
      $region17: #{discriminator_up_forward.1} parent=11 // pred_check
        %p227 = pneg %p97
      $region18: #{discriminator_up_forward.1} parent=11 // pred_check_branch
        %229 = sbr.rel (%p227) target = $region20
      $region19: #{discriminator_up_forward.1} parent=11 // pred_region
        _
      $region20: #{discriminator_up_forward.1} parent=11 // pred_fallthru
        _
      // Predicated region
      $region21: #{discriminator_up_forward.1} parent=11 // pred_check
        %p230 = pneg %p118
      $region22: #{discriminator_up_forward.1} parent=11 // pred_check_branch
        %232 = sbr.rel (%p230) target = $region24
      $region23: #{discriminator_up_forward.1} parent=11 // pred_region
        _
      $region24: #{discriminator_up_forward.1} parent=11 // pred_fallthru
        _
      // Predicated region
      $region25: #{discriminator_up_forward.1} parent=11 // pred_check
        %p233 = pneg %p139
      $region26: #{discriminator_up_forward.1} parent=11 // pred_check_branch
        %235 = sbr.rel (%p233) target = $region28
      $region27: #{discriminator_up_forward.1} parent=11 // pred_region
        _
      $region28: #{discriminator_up_forward.1} parent=11 // pred_fallthru
        _
      // Predicated region
      $region29: #{discriminator_up_forward.1} parent=11 // pred_check
        %p236 = pneg %p160
      $region30: #{discriminator_up_forward.1} parent=11 // pred_check_branch
        %238 = sbr.rel (%p236) target = $region32
      $region31: #{discriminator_up_forward.1} parent=11 // pred_region
        _
      $region32: #{discriminator_up_forward.1} parent=11 // pred_fallthru
        _
      // Predicated region
      $region33: #{discriminator_up_forward.1} parent=11 // pred_check
        %p239 = pneg %p181
      $region34: #{discriminator_up_forward.1} parent=11 // pred_check_branch
        %241 = sbr.rel (%p239) target = $region36
      $region35: #{discriminator_up_forward.1} parent=11 // pred_region
        _
      $region36: #{discriminator_up_forward.1} parent=11 // pred_fallthru
        _
    $region12: #{discriminator_up_forward.1} parent=5 // pred_fallthru
      _
    %p242 = scmp.lt.s32.totalorder %s15, 2
    // Predicated region
    $region37: #{discriminator_up_forward.1} parent=5 // pred_check
      %p243 = pneg %p242
    $region38: #{discriminator_up_forward.1} parent=5 // pred_check_branch
      %245 = sbr.rel (%p243) target = $region40
    $region39: #{discriminator_up_forward.1} parent=5 // pred_region
      // Predicated region
      $region41: #{discriminator_up_forward.1} parent=39 // pred_check
        %p246 = pneg %p49
      $region42: #{discriminator_up_forward.1} parent=39 // pred_check_branch
        %248 = sbr.rel (%p246) target = $region44
      $region43: #{discriminator_up_forward.1} parent=39 // pred_region
        %s249 = smul.u32 16, %s23
        %p250 = scmp.lt.s32.totalorder %s22, 1
        %s251 = scalar_select %p250, %s22, 1
        %p252 = scmp.lt.s32.totalorder %s249, 15
        %s253 = scalar_select %p252, %s249, 15
        %s254 = smul.addr %s253, 4
        %s255 = smul.addr %s251, 64
        %s256 = sadd.s32 %s254, %s255
        %s257 = smul.addr %s256, 4
        %s258 = scalar_lea.vmem %s0, %s257
        %s259 = smul.u32 16, %s23
      $region44: #{discriminator_up_forward.1} parent=39 // pred_fallthru
        _
    $region40: #{discriminator_up_forward.1} parent=5 // pred_fallthru
      _
    %p260 = scmp.le.s32.totalorder 1, %s15
    %p261 = scmp.lt.s32.totalorder %s15, 3
    %p262 = pnand %p260, %p261
    %p263 = pneg %p262
    // Predicated region
    $region45: #{discriminator_up_forward.1} parent=5 // pred_check
      _
    $region46: #{discriminator_up_forward.1} parent=5 // pred_check_branch
      %265 = sbr.rel (%p262) target = $region48
    $region47: #{discriminator_up_forward.1} parent=5 // pred_region
      %s266 = ssub.s32 %s15, 1
      %s267 = smul.u32 16, %s25
      %p268 = scmp.lt.s32.totalorder %s24, 1
      %s269 = scalar_select %p268, %s24, 1
      %p270 = scmp.lt.s32.totalorder %s267, 15
      %s271 = scalar_select %p270, %s267, 15
      %s272 = smul.addr %s271, 4
      %s273 = smul.addr %s269, 64
      %s274 = sadd.s32 %s272, %s273
      %s275 = smul.addr %s274, 4
      %s276 = scalar_lea.vmem %s0, %s275
      %p277 = pneg %p55
      %p278 = pneg %p52
      %p279 = pneg %p76
      %p280 = pneg %p73
      %p281 = pneg %p97
      %p282 = pneg %p94
      %p283 = pneg %p118
      %p284 = pneg %p115
      %p285 = pneg %p139
      %p286 = pneg %p136
      %p287 = pneg %p160
      %p288 = pneg %p157
      %p289 = pneg %p181
      %p290 = pneg %p178
      %p291 = pneg %p209
      %p292 = pneg %p206
      %s293 = smul.u32 2, %s25
      %p294 = scmp.lt.s32.totalorder %s24, 1
      %s295 = scalar_select %p294, %s24, 1
      %p296 = scmp.lt.s32.totalorder %s293, 1
      %s297 = scalar_select %p296, %s293, 1
      %s298 = smul.addr %s295, 2
      %s299 = sadd.s32 %s297, %s298
      %s300 = smul.addr %s299, 8
      %s301 = scalar_lea.vmem %s7, %s300
      %s302 = smul.u32 16, %s25
      %p303 = scmp.lt.s32.totalorder %s24, 1
      %s304 = scalar_select %p303, %s24, 1
      %p305 = scmp.lt.s32.totalorder %s302, 15
      %s306 = scalar_select %p305, %s302, 15
      %s307 = smul.addr %s306, 4
      %s308 = smul.addr %s304, 64
      %s309 = sadd.s32 %s307, %s308
      %s310 = smul.addr %s309, 4
      %s311 = scalar_lea.vmem %s0, %s310
      %s312 = smul.u32 16, %s25
      %s313 = smul.u32 2, %s25
      %p314 = scmp.lt.s32.totalorder %s24, 1
      %s315 = scalar_select %p314, %s24, 1
      %p316 = scmp.lt.s32.totalorder %s313, 1
      %s317 = scalar_select %p316, %s313, 1
      %s318 = smul.addr %s315, 2
      %s319 = sadd.s32 %s317, %s318
      %s320 = smul.addr %s319, 8
      %s321 = scalar_lea.vmem %s7, %s320
      %s322 = smul.u32 2, %s25
      %v324 = vld [vmem:[%s311] sm:$0xff]
      %v325 = vld [vmem:[%s311 + $0x8] sm:$0xff]
      %v326 = vld [vmem:[%s311 + $0x10] sm:$0xff]
      %v327 = vld [vmem:[%s311 + $0x18] sm:$0xff]
      %v328 = vld [vmem:[%s311 + $0x20] sm:$0xff]
      %v329 = vld [vmem:[%s311 + $0x28] sm:$0xff]
      %v330 = vld [vmem:[%s311 + $0x30] sm:$0xff]
      %v331 = vld [vmem:[%s311 + $0x38] sm:$0xff]
      %v332 = vld [vmem:[%s311 + $0x40] sm:$0xff]
      %v333 = vld [vmem:[%s311 + $0x48] sm:$0xff]
      %v334 = vld [vmem:[%s311 + $0x50] sm:$0xff]
      %v335 = vld [vmem:[%s311 + $0x58] sm:$0xff]
      %v336 = vld [vmem:[%s311 + $0x60] sm:$0xff]
      %v337 = vld [vmem:[%s311 + $0x68] sm:$0xff]
      %v338 = vld [vmem:[%s311 + $0x70] sm:$0xff]
      %v339 = vld [vmem:[%s311 + $0x78] sm:$0xff]
      %v340 = vld [vmem:[%s311 + $0x80] sm:$0xff]
      %v341 = vld [vmem:[%s311 + $0x88] sm:$0xff]
      %v342 = vld [vmem:[%s311 + $0x90] sm:$0xff]
      %v343 = vld [vmem:[%s311 + $0x98] sm:$0xff]
      %v344 = vld [vmem:[%s311 + $0xa0] sm:$0xff]
      %v345 = vld [vmem:[%s311 + $0xa8] sm:$0xff]
      %v346 = vld [vmem:[%s311 + $0xb0] sm:$0xff]
      %v347 = vld [vmem:[%s311 + $0xb8] sm:$0xff]
      %v348 = vld [vmem:[%s311 + $0xc0] sm:$0xff]
      %v349 = vld [vmem:[%s311 + $0xc8] sm:$0xff]
      %v350 = vld [vmem:[%s311 + $0xd0] sm:$0xff]
      %v351 = vld [vmem:[%s311 + $0xd8] sm:$0xff]
      %v352 = vld [vmem:[%s311 + $0xe0] sm:$0xff]
      %v353 = vld [vmem:[%s311 + $0xe8] sm:$0xff]
      %v354 = vld [vmem:[%s311 + $0xf0] sm:$0xff]
      %v355 = vld [vmem:[%s311 + $0xf8] sm:$0xff]
      %v356 = vld [vmem:[%s1] sm:$0xf]
      %v357 = vld [vmem:[%s1 + $0x4] sm:$0xf]
      %v358 = vld [vmem:[%s1 + $0x8] sm:$0xf]
      %v359 = vld [vmem:[%s1 + $0xc] sm:$0xf]
      %v360 = vld [vmem:[%s1 + $0x10] sm:$0xf]
      %v361 = vld [vmem:[%s1 + $0x14] sm:$0xf]
      %v362 = vld [vmem:[%s1 + $0x18] sm:$0xf]
      %v363 = vld [vmem:[%s1 + $0x1c] sm:$0xf]
      %v364 = vld [vmem:[%s1 + $0x20] sm:$0xf]
      %v365 = vld [vmem:[%s1 + $0x24] sm:$0xf]
      %v366 = vld [vmem:[%s1 + $0x28] sm:$0xf]
      %v367 = vld [vmem:[%s1 + $0x2c] sm:$0xf]
      %v368 = vld [vmem:[%s1 + $0x30] sm:$0xf]
      %v369 = vld [vmem:[%s1 + $0x34] sm:$0xf]
      %v370 = vld [vmem:[%s1 + $0x38] sm:$0xf]
      %v371 = vld [vmem:[%s1 + $0x3c] sm:$0xf]
      %v372 = vld [vmem:[%s1 + $0x40] sm:$0xf]
      %v373 = vld [vmem:[%s1 + $0x44] sm:$0xf]
      %v374 = vld [vmem:[%s1 + $0x48] sm:$0xf]
      %v375 = vld [vmem:[%s1 + $0x4c] sm:$0xf]
      %v376 = vld [vmem:[%s2] sm:$0x1]
      %v378 = vperm.slane %v376, 0
      %v412 = vunpack.c.l.b16 %v324
      %v413 = vunpack.c.h.b16 %v324
      %v414 = vunpack.c.l.b16 %v325
      %v415 = vunpack.c.h.b16 %v325
      %v416 = vunpack.c.l.b16 %v326
      %v417 = vunpack.c.h.b16 %v326
      %v418 = vunpack.c.l.b16 %v327
      %v419 = vunpack.c.h.b16 %v327
      %v420 = vunpack.c.l.b16 %v328
      %v421 = vunpack.c.h.b16 %v328
      %v422 = vunpack.c.l.b16 %v329
      %v423 = vunpack.c.h.b16 %v329
      %v424 = vunpack.c.l.b16 %v330
      %v425 = vunpack.c.h.b16 %v330
      %v426 = vunpack.c.l.b16 %v331
      %v427 = vunpack.c.h.b16 %v331
      %v428 = vunpack.c.l.b16 %v332
      %v429 = vunpack.c.h.b16 %v332
      %v430 = vunpack.c.l.b16 %v333
      %v431 = vunpack.c.h.b16 %v333
      %v432 = vunpack.c.l.b16 %v334
      %v433 = vunpack.c.h.b16 %v334
      %v434 = vunpack.c.l.b16 %v335
      %v435 = vunpack.c.h.b16 %v335
      %v436 = vunpack.c.l.b16 %v336
      %v437 = vunpack.c.h.b16 %v336
      %v438 = vunpack.c.l.b16 %v337
      %v439 = vunpack.c.h.b16 %v337
      %v440 = vunpack.c.l.b16 %v338
      %v441 = vunpack.c.h.b16 %v338
      %v442 = vunpack.c.l.b16 %v339
      %v443 = vunpack.c.h.b16 %v339
      %v444 = vunpack.c.l.b16 %v340
      %v445 = vunpack.c.h.b16 %v340
      %v446 = vunpack.c.l.b16 %v341
      %v447 = vunpack.c.h.b16 %v341
      %v448 = vunpack.c.l.b16 %v342
      %v449 = vunpack.c.h.b16 %v342
      %v450 = vunpack.c.l.b16 %v343
      %v451 = vunpack.c.h.b16 %v343
      %v452 = vunpack.c.l.b16 %v344
      %v453 = vunpack.c.h.b16 %v344
      %v454 = vunpack.c.l.b16 %v345
      %v455 = vunpack.c.h.b16 %v345
      %v456 = vunpack.c.l.b16 %v346
      %v457 = vunpack.c.h.b16 %v346
      %v458 = vunpack.c.l.b16 %v347
      %v459 = vunpack.c.h.b16 %v347
      %v460 = vunpack.c.l.b16 %v348
      %v461 = vunpack.c.h.b16 %v348
      %v462 = vunpack.c.l.b16 %v349
      %v463 = vunpack.c.h.b16 %v349
      %v464 = vunpack.c.l.b16 %v350
      %v465 = vunpack.c.h.b16 %v350
      %v466 = vunpack.c.l.b16 %v351
      %v467 = vunpack.c.h.b16 %v351
      %v468 = vunpack.c.l.b16 %v352
      %v469 = vunpack.c.h.b16 %v352
      %v470 = vunpack.c.l.b16 %v353
      %v471 = vunpack.c.h.b16 %v353
      %v472 = vunpack.c.l.b16 %v354
      %v473 = vunpack.c.h.b16 %v354
      %v474 = vunpack.c.l.b16 %v355
      %v475 = vunpack.c.h.b16 %v355
      %v476 = vpack.c.b16 %v414, %v412
      %v477 = vpack.c.b16 %v415, %v413
      %v478 = vpack.c.b16 %v418, %v416
      %v479 = vpack.c.b16 %v419, %v417
      %v480 = vpack.c.b16 %v422, %v420
      %v481 = vpack.c.b16 %v423, %v421
      %v482 = vpack.c.b16 %v426, %v424
      %v483 = vpack.c.b16 %v427, %v425
      %v484 = vpack.c.b16 %v430, %v428
      %v485 = vpack.c.b16 %v431, %v429
      %v486 = vpack.c.b16 %v434, %v432
      %v487 = vpack.c.b16 %v435, %v433
      %v488 = vpack.c.b16 %v438, %v436
      %v489 = vpack.c.b16 %v439, %v437
      %v490 = vpack.c.b16 %v442, %v440
      %v491 = vpack.c.b16 %v443, %v441
      %v492 = vpack.c.b16 %v446, %v444
      %v493 = vpack.c.b16 %v447, %v445
      %v494 = vpack.c.b16 %v450, %v448
      %v495 = vpack.c.b16 %v451, %v449
      %v496 = vpack.c.b16 %v454, %v452
      %v497 = vpack.c.b16 %v455, %v453
      %v498 = vpack.c.b16 %v458, %v456
      %v499 = vpack.c.b16 %v459, %v457
      %v500 = vpack.c.b16 %v462, %v460
      %v501 = vpack.c.b16 %v463, %v461
      %v502 = vpack.c.b16 %v466, %v464
      %v503 = vpack.c.b16 %v467, %v465
      %v504 = vpack.c.b16 %v470, %v468
      %v505 = vpack.c.b16 %v471, %v469
      %v506 = vpack.c.b16 %v474, %v472
      %v507 = vpack.c.b16 %v475, %v473
      %v544 = vunpack.c.l.b16 %v356
      %v545 = vunpack.c.l.b16 %v357
      %v546 = vunpack.c.l.b16 %v358
      %v547 = vunpack.c.l.b16 %v359
      %v548 = vunpack.c.l.b16 %v360
      %v549 = vunpack.c.l.b16 %v361
      %v550 = vunpack.c.l.b16 %v362
      %v551 = vunpack.c.l.b16 %v363
      %v552 = vunpack.c.l.b16 %v364
      %v553 = vunpack.c.l.b16 %v365
      %v554 = vunpack.c.l.b16 %v366
      %v555 = vunpack.c.l.b16 %v367
      %v556 = vunpack.c.l.b16 %v368
      %v557 = vunpack.c.l.b16 %v369
      %v558 = vunpack.c.l.b16 %v370
      %v559 = vunpack.c.l.b16 %v371
      %v560 = vunpack.c.l.b16 %v372
      %v561 = vunpack.c.l.b16 %v373
      %v562 = vunpack.c.l.b16 %v374
      %v563 = vunpack.c.l.b16 %v375
      %v564 = vpack.c.b16 %v545, %v544
      %v565 = vpack.c.b16 %v547, %v546
      %v566 = vpack.c.b16 %v549, %v548
      %v567 = vpack.c.b16 %v551, %v550
      %v568 = vpack.c.b16 %v553, %v552
      %v569 = vpack.c.b16 %v555, %v554
      %v570 = vpack.c.b16 %v557, %v556
      %v571 = vpack.c.b16 %v559, %v558
      %v572 = vpack.c.b16 %v561, %v560
      %v573 = vpack.c.b16 %v563, %v562
      %vm584 = vcmask 261120
      %v586 = vsel %vm584, %v477, 0
      %v589 = vsel %vm584, %v479, 0
      %v592 = vsel %vm584, %v481, 0
      %v595 = vsel %vm584, %v483, 0
      %v598 = vsel %vm584, %v485, 0
      %v601 = vsel %vm584, %v487, 0
      %v604 = vsel %vm584, %v489, 0
      %v607 = vsel %vm584, %v491, 0
      %v610 = vsel %vm584, %v493, 0
      %v613 = vsel %vm584, %v495, 0
      %v616 = vsel %vm584, %v497, 0
      %v619 = vsel %vm584, %v499, 0
      %v622 = vsel %vm584, %v501, 0
      %v625 = vsel %vm584, %v503, 0
      %v628 = vsel %vm584, %v505, 0
      %v631 = vsel %vm584, %v507, 0
      %633 = vmatpush.bf16.msra.mxu0 %v571
      %634 = vmatpush.bf16.msra.mxu0 %v570
      %635 = vmatpush.bf16.msra.mxu0 %v569
      %636 = vmatpush.bf16.msra.mxu0 %v568
      %637 = vmatpush.bf16.msra.mxu0 %v567
      %638 = vmatpush.bf16.msra.mxu0 %v566
      %639 = vmatpush.bf16.msra.mxu0 %v565
      %640 = vmatpush.bf16.msra.mxu0 %v564
      %641 = vmatmul.bf16.gmra.mxu0 %v476
      %v642 = vpop.f32.mrf.mxu0
      %v643 = vadd.f32 %v378, %v642
      %v644 = vpop.f32.mrf.mxu0
      %v645 = vadd.f32 %v378, %v644
      %646 = vmatmul.bf16.gmra.mxu0 %v478
      %v647 = vpop.f32.mrf.mxu0
      %v648 = vadd.f32 %v378, %v647
      %v649 = vpop.f32.mrf.mxu0
      %v650 = vadd.f32 %v378, %v649
      %651 = vmatmul.bf16.gmra.mxu0 %v480
      %v652 = vpop.f32.mrf.mxu0
      %v653 = vadd.f32 %v378, %v652
      %v654 = vpop.f32.mrf.mxu0
      %v655 = vadd.f32 %v378, %v654
      %656 = vmatmul.bf16.gmra.mxu0 %v482
      %v657 = vpop.f32.mrf.mxu0
      %v658 = vadd.f32 %v378, %v657
      %v659 = vpop.f32.mrf.mxu0
      %v660 = vadd.f32 %v378, %v659
      %661 = vmatmul.bf16.gmra.mxu0 %v484
      %v662 = vpop.f32.mrf.mxu0
      %v663 = vadd.f32 %v378, %v662
      %v664 = vpop.f32.mrf.mxu0
      %v665 = vadd.f32 %v378, %v664
      %666 = vmatmul.bf16.gmra.mxu0 %v486
      %v667 = vpop.f32.mrf.mxu0
      %v668 = vadd.f32 %v378, %v667
      %v669 = vpop.f32.mrf.mxu0
      %v670 = vadd.f32 %v378, %v669
      %671 = vmatmul.bf16.gmra.mxu0 %v488
      %v672 = vpop.f32.mrf.mxu0
      %v673 = vadd.f32 %v378, %v672
      %v674 = vpop.f32.mrf.mxu0
      %v675 = vadd.f32 %v378, %v674
      %676 = vmatmul.bf16.gmra.mxu0 %v490
      %v677 = vpop.f32.mrf.mxu0
      %v678 = vadd.f32 %v378, %v677
      %v679 = vpop.f32.mrf.mxu0
      %v680 = vadd.f32 %v378, %v679
      %681 = vmatmul.bf16.gmra.mxu0 %v492
      %v682 = vpop.f32.mrf.mxu0
      %v683 = vadd.f32 %v378, %v682
      %v684 = vpop.f32.mrf.mxu0
      %v685 = vadd.f32 %v378, %v684
      %686 = vmatmul.bf16.gmra.mxu0 %v494
      %v687 = vpop.f32.mrf.mxu0
      %v688 = vadd.f32 %v378, %v687
      %v689 = vpop.f32.mrf.mxu0
      %v690 = vadd.f32 %v378, %v689
      %691 = vmatmul.bf16.gmra.mxu0 %v496
      %v692 = vpop.f32.mrf.mxu0
      %v693 = vadd.f32 %v378, %v692
      %v694 = vpop.f32.mrf.mxu0
      %v695 = vadd.f32 %v378, %v694
      %696 = vmatmul.bf16.gmra.mxu0 %v498
      %v697 = vpop.f32.mrf.mxu0
      %v698 = vadd.f32 %v378, %v697
      %v699 = vpop.f32.mrf.mxu0
      %v700 = vadd.f32 %v378, %v699
      %701 = vmatmul.bf16.gmra.mxu0 %v500
      %v702 = vpop.f32.mrf.mxu0
      %v703 = vadd.f32 %v378, %v702
      %v704 = vpop.f32.mrf.mxu0
      %v705 = vadd.f32 %v378, %v704
      %706 = vmatmul.bf16.gmra.mxu0 %v502
      %v707 = vpop.f32.mrf.mxu0
      %v708 = vadd.f32 %v378, %v707
      %v709 = vpop.f32.mrf.mxu0
      %v710 = vadd.f32 %v378, %v709
      %711 = vmatmul.bf16.gmra.mxu0 %v504
      %v712 = vpop.f32.mrf.mxu0
      %v713 = vadd.f32 %v378, %v712
      %v714 = vpop.f32.mrf.mxu0
      %v715 = vadd.f32 %v378, %v714
      %716 = vmatmul.bf16.gmra.mxu0 %v506
      %v717 = vpop.f32.mrf.mxu0
      %v718 = vadd.f32 %v378, %v717
      %v719 = vpop.f32.mrf.mxu0
      %v720 = vadd.f32 %v378, %v719
      %721 = vdwg.mxu0
      %722 = vmatpush.bf16.msra.mxu0 0
      %723 = vmatpush.bf16.msra.mxu0 0
      %724 = vmatpush.bf16.msra.mxu0 0
      %725 = vmatpush.bf16.msra.mxu0 0
      %726 = vmatpush.bf16.msra.mxu0 0
      %727 = vmatpush.bf16.msra.mxu0 0
      %728 = vmatpush.bf16.msra.mxu0 %v573
      %729 = vmatpush.bf16.msra.mxu0 %v572
      %730 = vmatmul.bf16.gmra.mxu0 %v586
      %v731 = vpop.f32.mrf.mxu0
      %v732 = vadd.f32 %v643, %v731
      %v733 = vpop.f32.mrf.mxu0
      %v734 = vadd.f32 %v645, %v733
      %735 = vmatmul.bf16.gmra.mxu0 %v589
      %v736 = vpop.f32.mrf.mxu0
      %v737 = vadd.f32 %v648, %v736
      %v738 = vpop.f32.mrf.mxu0
      %v739 = vadd.f32 %v650, %v738
      %740 = vmatmul.bf16.gmra.mxu0 %v592
      %v741 = vpop.f32.mrf.mxu0
      %v742 = vadd.f32 %v653, %v741
      %v743 = vpop.f32.mrf.mxu0
      %v744 = vadd.f32 %v655, %v743
      %745 = vmatmul.bf16.gmra.mxu0 %v595
      %v746 = vpop.f32.mrf.mxu0
      %v747 = vadd.f32 %v658, %v746
      %v748 = vpop.f32.mrf.mxu0
      %v749 = vadd.f32 %v660, %v748
      %750 = vmatmul.bf16.gmra.mxu0 %v598
      %v751 = vpop.f32.mrf.mxu0
      %v752 = vadd.f32 %v663, %v751
      %v753 = vpop.f32.mrf.mxu0
      %v754 = vadd.f32 %v665, %v753
      %755 = vmatmul.bf16.gmra.mxu0 %v601
      %v756 = vpop.f32.mrf.mxu0
      %v757 = vadd.f32 %v668, %v756
      %v758 = vpop.f32.mrf.mxu0
      %v759 = vadd.f32 %v670, %v758
      %760 = vmatmul.bf16.gmra.mxu0 %v604
      %v761 = vpop.f32.mrf.mxu0
      %v762 = vadd.f32 %v673, %v761
      %v763 = vpop.f32.mrf.mxu0
      %v764 = vadd.f32 %v675, %v763
      %765 = vmatmul.bf16.gmra.mxu0 %v607
      %v766 = vpop.f32.mrf.mxu0
      %v767 = vadd.f32 %v678, %v766
      %v768 = vpop.f32.mrf.mxu0
      %v769 = vadd.f32 %v680, %v768
      %770 = vmatmul.bf16.gmra.mxu0 %v610
      %v771 = vpop.f32.mrf.mxu0
      %v772 = vadd.f32 %v683, %v771
      %v773 = vpop.f32.mrf.mxu0
      %v774 = vadd.f32 %v685, %v773
      %775 = vmatmul.bf16.gmra.mxu0 %v613
      %v776 = vpop.f32.mrf.mxu0
      %v777 = vadd.f32 %v688, %v776
      %v778 = vpop.f32.mrf.mxu0
      %v779 = vadd.f32 %v690, %v778
      %780 = vmatmul.bf16.gmra.mxu0 %v616
      %v781 = vpop.f32.mrf.mxu0
      %v782 = vadd.f32 %v693, %v781
      %v783 = vpop.f32.mrf.mxu0
      %v784 = vadd.f32 %v695, %v783
      %785 = vmatmul.bf16.gmra.mxu0 %v619
      %v786 = vpop.f32.mrf.mxu0
      %v787 = vadd.f32 %v698, %v786
      %v788 = vpop.f32.mrf.mxu0
      %v789 = vadd.f32 %v700, %v788
      %790 = vmatmul.bf16.gmra.mxu0 %v622
      %v791 = vpop.f32.mrf.mxu0
      %v792 = vadd.f32 %v703, %v791
      %v793 = vpop.f32.mrf.mxu0
      %v794 = vadd.f32 %v705, %v793
      %795 = vmatmul.bf16.gmra.mxu0 %v625
      %v796 = vpop.f32.mrf.mxu0
      %v797 = vadd.f32 %v708, %v796
      %v798 = vpop.f32.mrf.mxu0
      %v799 = vadd.f32 %v710, %v798
      %800 = vmatmul.bf16.gmra.mxu0 %v628
      %v801 = vpop.f32.mrf.mxu0
      %v802 = vadd.f32 %v713, %v801
      %v803 = vpop.f32.mrf.mxu0
      %v804 = vadd.f32 %v715, %v803
      %805 = vmatmul.bf16.gmra.mxu0 %v631
      %v806 = vpop.f32.mrf.mxu0
      %v807 = vadd.f32 %v718, %v806
      %v808 = vpop.f32.mrf.mxu0
      %v809 = vadd.f32 %v720, %v808
      %810 = vdwg.mxu0
      %v811 = vpack.c.bf16 %v734, %v732
      %v812 = vpack.c.bf16 %v739, %v737
      %v813 = vpack.c.bf16 %v744, %v742
      %v814 = vpack.c.bf16 %v749, %v747
      %v815 = vpack.c.bf16 %v754, %v752
      %v816 = vpack.c.bf16 %v759, %v757
      %v817 = vpack.c.bf16 %v764, %v762
      %v818 = vpack.c.bf16 %v769, %v767
      %v819 = vpack.c.bf16 %v774, %v772
      %v820 = vpack.c.bf16 %v779, %v777
      %v821 = vpack.c.bf16 %v784, %v782
      %v822 = vpack.c.bf16 %v789, %v787
      %v823 = vpack.c.bf16 %v794, %v792
      %v824 = vpack.c.bf16 %v799, %v797
      %v825 = vpack.c.bf16 %v804, %v802
      %v826 = vpack.c.bf16 %v809, %v807
      %v827 = vld [vmem:[%s3] sm:$0xf]
      %v828 = vld [vmem:[%s3 + $0x4] sm:$0xf]
      %v829 = vld [vmem:[%s3 + $0x8] sm:$0xf]
      %v830 = vld [vmem:[%s3 + $0xc] sm:$0xf]
      %v831 = vld [vmem:[%s3 + $0x10] sm:$0xf]
      %v832 = vld [vmem:[%s3 + $0x14] sm:$0xf]
      %v833 = vld [vmem:[%s3 + $0x18] sm:$0xf]
      %v834 = vld [vmem:[%s3 + $0x1c] sm:$0xf]
      %v835 = vld [vmem:[%s4] sm:$0x1]
      %v837 = vperm.slane %v835, 0
      %v847 = vunpack.c.l.b16 %v827
      %v848 = vunpack.c.l.b16 %v828
      %v849 = vunpack.c.l.b16 %v829
      %v850 = vunpack.c.l.b16 %v830
      %v851 = vunpack.c.l.b16 %v831
      %v852 = vunpack.c.l.b16 %v832
      %v853 = vunpack.c.l.b16 %v833
      %v854 = vunpack.c.l.b16 %v834
      %v855 = vpack.c.b16 %v848, %v847
      %v856 = vpack.c.b16 %v850, %v849
      %v857 = vpack.c.b16 %v852, %v851
      %v858 = vpack.c.b16 %v854, %v853
      %vm863 = vcmask 523264
      %v865 = vsel %vm863, %v811, 0
      %v868 = vsel %vm863, %v812, 0
      %v871 = vsel %vm863, %v813, 0
      %v874 = vsel %vm863, %v814, 0
      %v877 = vsel %vm863, %v815, 0
      %v880 = vsel %vm863, %v816, 0
      %v883 = vsel %vm863, %v817, 0
      %v886 = vsel %vm863, %v818, 0
      %v889 = vsel %vm863, %v819, 0
      %v892 = vsel %vm863, %v820, 0
      %v895 = vsel %vm863, %v821, 0
      %v898 = vsel %vm863, %v822, 0
      %v901 = vsel %vm863, %v823, 0
      %v904 = vsel %vm863, %v824, 0
      %v907 = vsel %vm863, %v825, 0
      %v910 = vsel %vm863, %v826, 0
      %912 = vmatpush.bf16.msra.mxu0 0
      %913 = vmatpush.bf16.msra.mxu0 0
      %914 = vmatpush.bf16.msra.mxu0 0
      %915 = vmatpush.bf16.msra.mxu0 0
      %916 = vmatpush.bf16.msra.mxu0 %v858
      %917 = vmatpush.bf16.msra.mxu0 %v857
      %918 = vmatpush.bf16.msra.mxu0 %v856
      %919 = vmatpush.bf16.msra.mxu0 %v855
      %920 = vmatmul.bf16.gmra.mxu0 %v865
      %v921 = vpop.f32.mrf.mxu0
      %v922 = vadd.f32 %v837, %v921
      %v923 = vpop.f32.mrf.mxu0
      %v924 = vadd.f32 %v837, %v923
      %925 = vmatmul.bf16.gmra.mxu0 %v868
      %v926 = vpop.f32.mrf.mxu0
      %v927 = vadd.f32 %v837, %v926
      %v928 = vpop.f32.mrf.mxu0
      %v929 = vadd.f32 %v837, %v928
      %930 = vmatmul.bf16.gmra.mxu0 %v871
      %v931 = vpop.f32.mrf.mxu0
      %v932 = vadd.f32 %v837, %v931
      %v933 = vpop.f32.mrf.mxu0
      %v934 = vadd.f32 %v837, %v933
      %935 = vmatmul.bf16.gmra.mxu0 %v874
      %v936 = vpop.f32.mrf.mxu0
      %v937 = vadd.f32 %v837, %v936
      %v938 = vpop.f32.mrf.mxu0
      %v939 = vadd.f32 %v837, %v938
      %940 = vmatmul.bf16.gmra.mxu0 %v877
      %v941 = vpop.f32.mrf.mxu0
      %v942 = vadd.f32 %v837, %v941
      %v943 = vpop.f32.mrf.mxu0
      %v944 = vadd.f32 %v837, %v943
      %945 = vmatmul.bf16.gmra.mxu0 %v880
      %v946 = vpop.f32.mrf.mxu0
      %v947 = vadd.f32 %v837, %v946
      %v948 = vpop.f32.mrf.mxu0
      %v949 = vadd.f32 %v837, %v948
      %950 = vmatmul.bf16.gmra.mxu0 %v883
      %v951 = vpop.f32.mrf.mxu0
      %v952 = vadd.f32 %v837, %v951
      %v953 = vpop.f32.mrf.mxu0
      %v954 = vadd.f32 %v837, %v953
      %955 = vmatmul.bf16.gmra.mxu0 %v886
      %v956 = vpop.f32.mrf.mxu0
      %v957 = vadd.f32 %v837, %v956
      %v958 = vpop.f32.mrf.mxu0
      %v959 = vadd.f32 %v837, %v958
      %960 = vmatmul.bf16.gmra.mxu0 %v889
      %v961 = vpop.f32.mrf.mxu0
      %v962 = vadd.f32 %v837, %v961
      %v963 = vpop.f32.mrf.mxu0
      %v964 = vadd.f32 %v837, %v963
      %965 = vmatmul.bf16.gmra.mxu0 %v892
      %v966 = vpop.f32.mrf.mxu0
      %v967 = vadd.f32 %v837, %v966
      %v968 = vpop.f32.mrf.mxu0
      %v969 = vadd.f32 %v837, %v968
      %970 = vmatmul.bf16.gmra.mxu0 %v895
      %v971 = vpop.f32.mrf.mxu0
      %v972 = vadd.f32 %v837, %v971
      %v973 = vpop.f32.mrf.mxu0
      %v974 = vadd.f32 %v837, %v973
      %975 = vmatmul.bf16.gmra.mxu0 %v898
      %v976 = vpop.f32.mrf.mxu0
      %v977 = vadd.f32 %v837, %v976
      %v978 = vpop.f32.mrf.mxu0
      %v979 = vadd.f32 %v837, %v978
      %980 = vmatmul.bf16.gmra.mxu0 %v901
      %v981 = vpop.f32.mrf.mxu0
      %v982 = vadd.f32 %v837, %v981
      %v983 = vpop.f32.mrf.mxu0
      %v984 = vadd.f32 %v837, %v983
      %985 = vmatmul.bf16.gmra.mxu0 %v904
      %v986 = vpop.f32.mrf.mxu0
      %v987 = vadd.f32 %v837, %v986
      %v988 = vpop.f32.mrf.mxu0
      %v989 = vadd.f32 %v837, %v988
      %990 = vmatmul.bf16.gmra.mxu0 %v907
      %v991 = vpop.f32.mrf.mxu0
      %v992 = vadd.f32 %v837, %v991
      %v993 = vpop.f32.mrf.mxu0
      %v994 = vadd.f32 %v837, %v993
      %995 = vmatmul.bf16.gmra.mxu0 %v910
      %v996 = vpop.f32.mrf.mxu0
      %v997 = vadd.f32 %v837, %v996
      %v998 = vpop.f32.mrf.mxu0
      %v999 = vadd.f32 %v837, %v998
      %1000 = vdwg.mxu0
      %v1001 = vmax.f32 %v922, 0.0
      %v1002 = vmax.f32 %v924, 0.0
      %v1003 = vmax.f32 %v927, 0.0
      %v1004 = vmax.f32 %v929, 0.0
      %v1005 = vmax.f32 %v932, 0.0
      %v1006 = vmax.f32 %v934, 0.0
      %v1007 = vmax.f32 %v937, 0.0
      %v1008 = vmax.f32 %v939, 0.0
      %v1009 = vmax.f32 %v942, 0.0
      %v1010 = vmax.f32 %v944, 0.0
      %v1011 = vmax.f32 %v947, 0.0
      %v1012 = vmax.f32 %v949, 0.0
      %v1013 = vmax.f32 %v952, 0.0
      %v1014 = vmax.f32 %v954, 0.0
      %v1015 = vmax.f32 %v957, 0.0
      %v1016 = vmax.f32 %v959, 0.0
      %v1017 = vmax.f32 %v962, 0.0
      %v1018 = vmax.f32 %v964, 0.0
      %v1019 = vmax.f32 %v967, 0.0
      %v1020 = vmax.f32 %v969, 0.0
      %v1021 = vmax.f32 %v972, 0.0
      %v1022 = vmax.f32 %v974, 0.0
      %v1023 = vmax.f32 %v977, 0.0
      %v1024 = vmax.f32 %v979, 0.0
      %v1025 = vmax.f32 %v982, 0.0
      %v1026 = vmax.f32 %v984, 0.0
      %v1027 = vmax.f32 %v987, 0.0
      %v1028 = vmax.f32 %v989, 0.0
      %v1029 = vmax.f32 %v992, 0.0
      %v1030 = vmax.f32 %v994, 0.0
      %v1031 = vmax.f32 %v997, 0.0
      %v1032 = vmax.f32 %v999, 0.0
      %v1033 = vpack.c.bf16 %v1002, %v1001
      %v1034 = vpack.c.bf16 %v1004, %v1003
      %v1035 = vpack.c.bf16 %v1006, %v1005
      %v1036 = vpack.c.bf16 %v1008, %v1007
      %v1037 = vpack.c.bf16 %v1010, %v1009
      %v1038 = vpack.c.bf16 %v1012, %v1011
      %v1039 = vpack.c.bf16 %v1014, %v1013
      %v1040 = vpack.c.bf16 %v1016, %v1015
      %v1041 = vpack.c.bf16 %v1018, %v1017
      %v1042 = vpack.c.bf16 %v1020, %v1019
      %v1043 = vpack.c.bf16 %v1022, %v1021
      %v1044 = vpack.c.bf16 %v1024, %v1023
      %v1045 = vpack.c.bf16 %v1026, %v1025
      %v1046 = vpack.c.bf16 %v1028, %v1027
      %v1047 = vpack.c.bf16 %v1030, %v1029
      %v1048 = vpack.c.bf16 %v1032, %v1031
      %s1049 = scalar_lea.vmem %s3, 32
      %v1050 = vld [vmem:[%s1049] sm:$0xf]
      %v1051 = vld [vmem:[%s1049 + $0x4] sm:$0xf]
      %v1052 = vld [vmem:[%s1049 + $0x8] sm:$0xf]
      %v1053 = vld [vmem:[%s1049 + $0xc] sm:$0xf]
      %v1054 = vld [vmem:[%s1049 + $0x10] sm:$0xf]
      %v1055 = vld [vmem:[%s1049 + $0x14] sm:$0xf]
      %v1056 = vld [vmem:[%s1049 + $0x18] sm:$0xf]
      %v1057 = vld [vmem:[%s1049 + $0x1c] sm:$0xf]
      %s1058 = scalar_lea.vmem %s4, 1
      %v1059 = vld [vmem:[%s1058] sm:$0x1]
      %v1061 = vperm.slane %v1059, 0
      %v1071 = vunpack.c.l.b16 %v1050
      %v1072 = vunpack.c.l.b16 %v1051
      %v1073 = vunpack.c.l.b16 %v1052
      %v1074 = vunpack.c.l.b16 %v1053
      %v1075 = vunpack.c.l.b16 %v1054
      %v1076 = vunpack.c.l.b16 %v1055
      %v1077 = vunpack.c.l.b16 %v1056
      %v1078 = vunpack.c.l.b16 %v1057
      %v1079 = vpack.c.b16 %v1072, %v1071
      %v1080 = vpack.c.b16 %v1074, %v1073
      %v1081 = vpack.c.b16 %v1076, %v1075
      %v1082 = vpack.c.b16 %v1078, %v1077
      %v1088 = vsel %vm863, %v1033, 0
      %v1091 = vsel %vm863, %v1034, 0
      %v1094 = vsel %vm863, %v1035, 0
      %v1097 = vsel %vm863, %v1036, 0
      %v1100 = vsel %vm863, %v1037, 0
      %v1103 = vsel %vm863, %v1038, 0
      %v1106 = vsel %vm863, %v1039, 0
      %v1109 = vsel %vm863, %v1040, 0
      %v1112 = vsel %vm863, %v1041, 0
      %v1115 = vsel %vm863, %v1042, 0
      %v1118 = vsel %vm863, %v1043, 0
      %v1121 = vsel %vm863, %v1044, 0
      %v1124 = vsel %vm863, %v1045, 0
      %v1127 = vsel %vm863, %v1046, 0
      %v1130 = vsel %vm863, %v1047, 0
      %v1133 = vsel %vm863, %v1048, 0
      %1135 = vmatpush.bf16.msra.mxu0 0
      %1136 = vmatpush.bf16.msra.mxu0 0
      %1137 = vmatpush.bf16.msra.mxu0 0
      %1138 = vmatpush.bf16.msra.mxu0 0
      %1139 = vmatpush.bf16.msra.mxu0 %v1082
      %1140 = vmatpush.bf16.msra.mxu0 %v1081
      %1141 = vmatpush.bf16.msra.mxu0 %v1080
      %1142 = vmatpush.bf16.msra.mxu0 %v1079
      %1143 = vmatmul.bf16.gmra.mxu0 %v1088
      %v1144 = vpop.f32.mrf.mxu0
      %v1145 = vadd.f32 %v1061, %v1144
      %v1146 = vpop.f32.mrf.mxu0
      %v1147 = vadd.f32 %v1061, %v1146
      %1148 = vmatmul.bf16.gmra.mxu0 %v1091
      %v1149 = vpop.f32.mrf.mxu0
      %v1150 = vadd.f32 %v1061, %v1149
      %v1151 = vpop.f32.mrf.mxu0
      %v1152 = vadd.f32 %v1061, %v1151
      %1153 = vmatmul.bf16.gmra.mxu0 %v1094
      %v1154 = vpop.f32.mrf.mxu0
      %v1155 = vadd.f32 %v1061, %v1154
      %v1156 = vpop.f32.mrf.mxu0
      %v1157 = vadd.f32 %v1061, %v1156
      %1158 = vmatmul.bf16.gmra.mxu0 %v1097
      %v1159 = vpop.f32.mrf.mxu0
      %v1160 = vadd.f32 %v1061, %v1159
      %v1161 = vpop.f32.mrf.mxu0
      %v1162 = vadd.f32 %v1061, %v1161
      %1163 = vmatmul.bf16.gmra.mxu0 %v1100
      %v1164 = vpop.f32.mrf.mxu0
      %v1165 = vadd.f32 %v1061, %v1164
      %v1166 = vpop.f32.mrf.mxu0
      %v1167 = vadd.f32 %v1061, %v1166
      %1168 = vmatmul.bf16.gmra.mxu0 %v1103
      %v1169 = vpop.f32.mrf.mxu0
      %v1170 = vadd.f32 %v1061, %v1169
      %v1171 = vpop.f32.mrf.mxu0
      %v1172 = vadd.f32 %v1061, %v1171
      %1173 = vmatmul.bf16.gmra.mxu0 %v1106
      %v1174 = vpop.f32.mrf.mxu0
      %v1175 = vadd.f32 %v1061, %v1174
      %v1176 = vpop.f32.mrf.mxu0
      %v1177 = vadd.f32 %v1061, %v1176
      %1178 = vmatmul.bf16.gmra.mxu0 %v1109
      %v1179 = vpop.f32.mrf.mxu0
      %v1180 = vadd.f32 %v1061, %v1179
      %v1181 = vpop.f32.mrf.mxu0
      %v1182 = vadd.f32 %v1061, %v1181
      %1183 = vmatmul.bf16.gmra.mxu0 %v1112
      %v1184 = vpop.f32.mrf.mxu0
      %v1185 = vadd.f32 %v1061, %v1184
      %v1186 = vpop.f32.mrf.mxu0
      %v1187 = vadd.f32 %v1061, %v1186
      %1188 = vmatmul.bf16.gmra.mxu0 %v1115
      %v1189 = vpop.f32.mrf.mxu0
      %v1190 = vadd.f32 %v1061, %v1189
      %v1191 = vpop.f32.mrf.mxu0
      %v1192 = vadd.f32 %v1061, %v1191
      %1193 = vmatmul.bf16.gmra.mxu0 %v1118
      %v1194 = vpop.f32.mrf.mxu0
      %v1195 = vadd.f32 %v1061, %v1194
      %v1196 = vpop.f32.mrf.mxu0
      %v1197 = vadd.f32 %v1061, %v1196
      %1198 = vmatmul.bf16.gmra.mxu0 %v1121
      %v1199 = vpop.f32.mrf.mxu0
      %v1200 = vadd.f32 %v1061, %v1199
      %v1201 = vpop.f32.mrf.mxu0
      %v1202 = vadd.f32 %v1061, %v1201
      %1203 = vmatmul.bf16.gmra.mxu0 %v1124
      %v1204 = vpop.f32.mrf.mxu0
      %v1205 = vadd.f32 %v1061, %v1204
      %v1206 = vpop.f32.mrf.mxu0
      %v1207 = vadd.f32 %v1061, %v1206
      %1208 = vmatmul.bf16.gmra.mxu0 %v1127
      %v1209 = vpop.f32.mrf.mxu0
      %v1210 = vadd.f32 %v1061, %v1209
      %v1211 = vpop.f32.mrf.mxu0
      %v1212 = vadd.f32 %v1061, %v1211
      %1213 = vmatmul.bf16.gmra.mxu0 %v1130
      %v1214 = vpop.f32.mrf.mxu0
      %v1215 = vadd.f32 %v1061, %v1214
      %v1216 = vpop.f32.mrf.mxu0
      %v1217 = vadd.f32 %v1061, %v1216
      %1218 = vmatmul.bf16.gmra.mxu0 %v1133
      %v1219 = vpop.f32.mrf.mxu0
      %v1220 = vadd.f32 %v1061, %v1219
      %v1221 = vpop.f32.mrf.mxu0
      %v1222 = vadd.f32 %v1061, %v1221
      %1223 = vdwg.mxu0
      %v1224 = vmax.f32 %v1145, 0.0
      %v1225 = vmax.f32 %v1147, 0.0
      %v1226 = vmax.f32 %v1150, 0.0
      %v1227 = vmax.f32 %v1152, 0.0
      %v1228 = vmax.f32 %v1155, 0.0
      %v1229 = vmax.f32 %v1157, 0.0
      %v1230 = vmax.f32 %v1160, 0.0
      %v1231 = vmax.f32 %v1162, 0.0
      %v1232 = vmax.f32 %v1165, 0.0
      %v1233 = vmax.f32 %v1167, 0.0
      %v1234 = vmax.f32 %v1170, 0.0
      %v1235 = vmax.f32 %v1172, 0.0
      %v1236 = vmax.f32 %v1175, 0.0
      %v1237 = vmax.f32 %v1177, 0.0
      %v1238 = vmax.f32 %v1180, 0.0
      %v1239 = vmax.f32 %v1182, 0.0
      %v1240 = vmax.f32 %v1185, 0.0
      %v1241 = vmax.f32 %v1187, 0.0
      %v1242 = vmax.f32 %v1190, 0.0
      %v1243 = vmax.f32 %v1192, 0.0
      %v1244 = vmax.f32 %v1195, 0.0
      %v1245 = vmax.f32 %v1197, 0.0
      %v1246 = vmax.f32 %v1200, 0.0
      %v1247 = vmax.f32 %v1202, 0.0
      %v1248 = vmax.f32 %v1205, 0.0
      %v1249 = vmax.f32 %v1207, 0.0
      %v1250 = vmax.f32 %v1210, 0.0
      %v1251 = vmax.f32 %v1212, 0.0
      %v1252 = vmax.f32 %v1215, 0.0
      %v1253 = vmax.f32 %v1217, 0.0
      %v1254 = vmax.f32 %v1220, 0.0
      %v1255 = vmax.f32 %v1222, 0.0
      %v1256 = vpack.c.bf16 %v1225, %v1224
      %v1257 = vpack.c.bf16 %v1227, %v1226
      %v1258 = vpack.c.bf16 %v1229, %v1228
      %v1259 = vpack.c.bf16 %v1231, %v1230
      %v1260 = vpack.c.bf16 %v1233, %v1232
      %v1261 = vpack.c.bf16 %v1235, %v1234
      %v1262 = vpack.c.bf16 %v1237, %v1236
      %v1263 = vpack.c.bf16 %v1239, %v1238
      %v1264 = vpack.c.bf16 %v1241, %v1240
      %v1265 = vpack.c.bf16 %v1243, %v1242
      %v1266 = vpack.c.bf16 %v1245, %v1244
      %v1267 = vpack.c.bf16 %v1247, %v1246
      %v1268 = vpack.c.bf16 %v1249, %v1248
      %v1269 = vpack.c.bf16 %v1251, %v1250
      %v1270 = vpack.c.bf16 %v1253, %v1252
      %v1271 = vpack.c.bf16 %v1255, %v1254
      %s1272 = scalar_lea.vmem %s3, 64
      %v1273 = vld [vmem:[%s1272] sm:$0xf]
      %v1274 = vld [vmem:[%s1272 + $0x4] sm:$0xf]
      %v1275 = vld [vmem:[%s1272 + $0x8] sm:$0xf]
      %v1276 = vld [vmem:[%s1272 + $0xc] sm:$0xf]
      %v1277 = vld [vmem:[%s1272 + $0x10] sm:$0xf]
      %v1278 = vld [vmem:[%s1272 + $0x14] sm:$0xf]
      %v1279 = vld [vmem:[%s1272 + $0x18] sm:$0xf]
      %v1280 = vld [vmem:[%s1272 + $0x1c] sm:$0xf]
      %s1281 = scalar_lea.vmem %s4, 2
      %v1282 = vld [vmem:[%s1281] sm:$0x1]
      %v1284 = vperm.slane %v1282, 0
      %v1294 = vunpack.c.l.b16 %v1273
      %v1295 = vunpack.c.l.b16 %v1274
      %v1296 = vunpack.c.l.b16 %v1275
      %v1297 = vunpack.c.l.b16 %v1276
      %v1298 = vunpack.c.l.b16 %v1277
      %v1299 = vunpack.c.l.b16 %v1278
      %v1300 = vunpack.c.l.b16 %v1279
      %v1301 = vunpack.c.l.b16 %v1280
      %v1302 = vpack.c.b16 %v1295, %v1294
      %v1303 = vpack.c.b16 %v1297, %v1296
      %v1304 = vpack.c.b16 %v1299, %v1298
      %v1305 = vpack.c.b16 %v1301, %v1300
      %v1311 = vsel %vm863, %v1256, 0
      %v1314 = vsel %vm863, %v1257, 0
      %v1317 = vsel %vm863, %v1258, 0
      %v1320 = vsel %vm863, %v1259, 0
      %v1323 = vsel %vm863, %v1260, 0
      %v1326 = vsel %vm863, %v1261, 0
      %v1329 = vsel %vm863, %v1262, 0
      %v1332 = vsel %vm863, %v1263, 0
      %v1335 = vsel %vm863, %v1264, 0
      %v1338 = vsel %vm863, %v1265, 0
      %v1341 = vsel %vm863, %v1266, 0
      %v1344 = vsel %vm863, %v1267, 0
      %v1347 = vsel %vm863, %v1268, 0
      %v1350 = vsel %vm863, %v1269, 0
      %v1353 = vsel %vm863, %v1270, 0
      %v1356 = vsel %vm863, %v1271, 0
      %1358 = vmatpush.bf16.msra.mxu0 0
      %1359 = vmatpush.bf16.msra.mxu0 0
      %1360 = vmatpush.bf16.msra.mxu0 0
      %1361 = vmatpush.bf16.msra.mxu0 0
      %1362 = vmatpush.bf16.msra.mxu0 %v1305
      %1363 = vmatpush.bf16.msra.mxu0 %v1304
      %1364 = vmatpush.bf16.msra.mxu0 %v1303
      %1365 = vmatpush.bf16.msra.mxu0 %v1302
      %1366 = vmatmul.bf16.gmra.mxu0 %v1311
      %v1367 = vpop.f32.mrf.mxu0
      %v1368 = vadd.f32 %v1284, %v1367
      %v1369 = vpop.f32.mrf.mxu0
      %v1370 = vadd.f32 %v1284, %v1369
      %1371 = vmatmul.bf16.gmra.mxu0 %v1314
      %v1372 = vpop.f32.mrf.mxu0
      %v1373 = vadd.f32 %v1284, %v1372
      %v1374 = vpop.f32.mrf.mxu0
      %v1375 = vadd.f32 %v1284, %v1374
      %1376 = vmatmul.bf16.gmra.mxu0 %v1317
      %v1377 = vpop.f32.mrf.mxu0
      %v1378 = vadd.f32 %v1284, %v1377
      %v1379 = vpop.f32.mrf.mxu0
      %v1380 = vadd.f32 %v1284, %v1379
      %1381 = vmatmul.bf16.gmra.mxu0 %v1320
      %v1382 = vpop.f32.mrf.mxu0
      %v1383 = vadd.f32 %v1284, %v1382
      %v1384 = vpop.f32.mrf.mxu0
      %v1385 = vadd.f32 %v1284, %v1384
      %1386 = vmatmul.bf16.gmra.mxu0 %v1323
      %v1387 = vpop.f32.mrf.mxu0
      %v1388 = vadd.f32 %v1284, %v1387
      %v1389 = vpop.f32.mrf.mxu0
      %v1390 = vadd.f32 %v1284, %v1389
      %1391 = vmatmul.bf16.gmra.mxu0 %v1326
      %v1392 = vpop.f32.mrf.mxu0
      %v1393 = vadd.f32 %v1284, %v1392
      %v1394 = vpop.f32.mrf.mxu0
      %v1395 = vadd.f32 %v1284, %v1394
      %1396 = vmatmul.bf16.gmra.mxu0 %v1329
      %v1397 = vpop.f32.mrf.mxu0
      %v1398 = vadd.f32 %v1284, %v1397
      %v1399 = vpop.f32.mrf.mxu0
      %v1400 = vadd.f32 %v1284, %v1399
      %1401 = vmatmul.bf16.gmra.mxu0 %v1332
      %v1402 = vpop.f32.mrf.mxu0
      %v1403 = vadd.f32 %v1284, %v1402
      %v1404 = vpop.f32.mrf.mxu0
      %v1405 = vadd.f32 %v1284, %v1404
      %1406 = vmatmul.bf16.gmra.mxu0 %v1335
      %v1407 = vpop.f32.mrf.mxu0
      %v1408 = vadd.f32 %v1284, %v1407
      %v1409 = vpop.f32.mrf.mxu0
      %v1410 = vadd.f32 %v1284, %v1409
      %1411 = vmatmul.bf16.gmra.mxu0 %v1338
      %v1412 = vpop.f32.mrf.mxu0
      %v1413 = vadd.f32 %v1284, %v1412
      %v1414 = vpop.f32.mrf.mxu0
      %v1415 = vadd.f32 %v1284, %v1414
      %1416 = vmatmul.bf16.gmra.mxu0 %v1341
      %v1417 = vpop.f32.mrf.mxu0
      %v1418 = vadd.f32 %v1284, %v1417
      %v1419 = vpop.f32.mrf.mxu0
      %v1420 = vadd.f32 %v1284, %v1419
      %1421 = vmatmul.bf16.gmra.mxu0 %v1344
      %v1422 = vpop.f32.mrf.mxu0
      %v1423 = vadd.f32 %v1284, %v1422
      %v1424 = vpop.f32.mrf.mxu0
      %v1425 = vadd.f32 %v1284, %v1424
      %1426 = vmatmul.bf16.gmra.mxu0 %v1347
      %v1427 = vpop.f32.mrf.mxu0
      %v1428 = vadd.f32 %v1284, %v1427
      %v1429 = vpop.f32.mrf.mxu0
      %v1430 = vadd.f32 %v1284, %v1429
      %1431 = vmatmul.bf16.gmra.mxu0 %v1350
      %v1432 = vpop.f32.mrf.mxu0
      %v1433 = vadd.f32 %v1284, %v1432
      %v1434 = vpop.f32.mrf.mxu0
      %v1435 = vadd.f32 %v1284, %v1434
      %1436 = vmatmul.bf16.gmra.mxu0 %v1353
      %v1437 = vpop.f32.mrf.mxu0
      %v1438 = vadd.f32 %v1284, %v1437
      %v1439 = vpop.f32.mrf.mxu0
      %v1440 = vadd.f32 %v1284, %v1439
      %1441 = vmatmul.bf16.gmra.mxu0 %v1356
      %v1442 = vpop.f32.mrf.mxu0
      %v1443 = vadd.f32 %v1284, %v1442
      %v1444 = vpop.f32.mrf.mxu0
      %v1445 = vadd.f32 %v1284, %v1444
      %1446 = vdwg.mxu0
      %v1447 = vmax.f32 %v1368, 0.0
      %v1448 = vmax.f32 %v1370, 0.0
      %v1449 = vmax.f32 %v1373, 0.0
      %v1450 = vmax.f32 %v1375, 0.0
      %v1451 = vmax.f32 %v1378, 0.0
      %v1452 = vmax.f32 %v1380, 0.0
      %v1453 = vmax.f32 %v1383, 0.0
      %v1454 = vmax.f32 %v1385, 0.0
      %v1455 = vmax.f32 %v1388, 0.0
      %v1456 = vmax.f32 %v1390, 0.0
      %v1457 = vmax.f32 %v1393, 0.0
      %v1458 = vmax.f32 %v1395, 0.0
      %v1459 = vmax.f32 %v1398, 0.0
      %v1460 = vmax.f32 %v1400, 0.0
      %v1461 = vmax.f32 %v1403, 0.0
      %v1462 = vmax.f32 %v1405, 0.0
      %v1463 = vmax.f32 %v1408, 0.0
      %v1464 = vmax.f32 %v1410, 0.0
      %v1465 = vmax.f32 %v1413, 0.0
      %v1466 = vmax.f32 %v1415, 0.0
      %v1467 = vmax.f32 %v1418, 0.0
      %v1468 = vmax.f32 %v1420, 0.0
      %v1469 = vmax.f32 %v1423, 0.0
      %v1470 = vmax.f32 %v1425, 0.0
      %v1471 = vmax.f32 %v1428, 0.0
      %v1472 = vmax.f32 %v1430, 0.0
      %v1473 = vmax.f32 %v1433, 0.0
      %v1474 = vmax.f32 %v1435, 0.0
      %v1475 = vmax.f32 %v1438, 0.0
      %v1476 = vmax.f32 %v1440, 0.0
      %v1477 = vmax.f32 %v1443, 0.0
      %v1478 = vmax.f32 %v1445, 0.0
      %v1479 = vpack.c.bf16 %v1448, %v1447
      %v1480 = vpack.c.bf16 %v1450, %v1449
      %v1481 = vpack.c.bf16 %v1452, %v1451
      %v1482 = vpack.c.bf16 %v1454, %v1453
      %v1483 = vpack.c.bf16 %v1456, %v1455
      %v1484 = vpack.c.bf16 %v1458, %v1457
      %v1485 = vpack.c.bf16 %v1460, %v1459
      %v1486 = vpack.c.bf16 %v1462, %v1461
      %v1487 = vpack.c.bf16 %v1464, %v1463
      %v1488 = vpack.c.bf16 %v1466, %v1465
      %v1489 = vpack.c.bf16 %v1468, %v1467
      %v1490 = vpack.c.bf16 %v1470, %v1469
      %v1491 = vpack.c.bf16 %v1472, %v1471
      %v1492 = vpack.c.bf16 %v1474, %v1473
      %v1493 = vpack.c.bf16 %v1476, %v1475
      %v1494 = vpack.c.bf16 %v1478, %v1477
      %s1495 = scalar_lea.vmem %s3, 96
      %v1496 = vld [vmem:[%s1495] sm:$0xf]
      %v1497 = vld [vmem:[%s1495 + $0x4] sm:$0xf]
      %v1498 = vld [vmem:[%s1495 + $0x8] sm:$0xf]
      %v1499 = vld [vmem:[%s1495 + $0xc] sm:$0xf]
      %v1500 = vld [vmem:[%s1495 + $0x10] sm:$0xf]
      %v1501 = vld [vmem:[%s1495 + $0x14] sm:$0xf]
      %v1502 = vld [vmem:[%s1495 + $0x18] sm:$0xf]
      %v1503 = vld [vmem:[%s1495 + $0x1c] sm:$0xf]
      %s1504 = scalar_lea.vmem %s4, 3
      %v1505 = vld [vmem:[%s1504] sm:$0x1]
      %v1507 = vperm.slane %v1505, 0
      %v1517 = vunpack.c.l.b16 %v1496
      %v1518 = vunpack.c.l.b16 %v1497
      %v1519 = vunpack.c.l.b16 %v1498
      %v1520 = vunpack.c.l.b16 %v1499
      %v1521 = vunpack.c.l.b16 %v1500
      %v1522 = vunpack.c.l.b16 %v1501
      %v1523 = vunpack.c.l.b16 %v1502
      %v1524 = vunpack.c.l.b16 %v1503
      %v1525 = vpack.c.b16 %v1518, %v1517
      %v1526 = vpack.c.b16 %v1520, %v1519
      %v1527 = vpack.c.b16 %v1522, %v1521
      %v1528 = vpack.c.b16 %v1524, %v1523
      %v1534 = vsel %vm863, %v1479, 0
      %v1537 = vsel %vm863, %v1480, 0
      %v1540 = vsel %vm863, %v1481, 0
      %v1543 = vsel %vm863, %v1482, 0
      %v1546 = vsel %vm863, %v1483, 0
      %v1549 = vsel %vm863, %v1484, 0
      %v1552 = vsel %vm863, %v1485, 0
      %v1555 = vsel %vm863, %v1486, 0
      %v1558 = vsel %vm863, %v1487, 0
      %v1561 = vsel %vm863, %v1488, 0
      %v1564 = vsel %vm863, %v1489, 0
      %v1567 = vsel %vm863, %v1490, 0
      %v1570 = vsel %vm863, %v1491, 0
      %v1573 = vsel %vm863, %v1492, 0
      %v1576 = vsel %vm863, %v1493, 0
      %v1579 = vsel %vm863, %v1494, 0
      %1581 = vmatpush.bf16.msra.mxu0 0
      %1582 = vmatpush.bf16.msra.mxu0 0
      %1583 = vmatpush.bf16.msra.mxu0 0
      %1584 = vmatpush.bf16.msra.mxu0 0
      %1585 = vmatpush.bf16.msra.mxu0 %v1528
      %1586 = vmatpush.bf16.msra.mxu0 %v1527
      %1587 = vmatpush.bf16.msra.mxu0 %v1526
      %1588 = vmatpush.bf16.msra.mxu0 %v1525
      %1589 = vmatmul.bf16.gmra.mxu0 %v1534
      %v1590 = vpop.f32.mrf.mxu0
      %v1591 = vadd.f32 %v1507, %v1590
      %v1592 = vpop.f32.mrf.mxu0
      %v1593 = vadd.f32 %v1507, %v1592
      %1594 = vmatmul.bf16.gmra.mxu0 %v1537
      %v1595 = vpop.f32.mrf.mxu0
      %v1596 = vadd.f32 %v1507, %v1595
      %v1597 = vpop.f32.mrf.mxu0
      %v1598 = vadd.f32 %v1507, %v1597
      %1599 = vmatmul.bf16.gmra.mxu0 %v1540
      %v1600 = vpop.f32.mrf.mxu0
      %v1601 = vadd.f32 %v1507, %v1600
      %v1602 = vpop.f32.mrf.mxu0
      %v1603 = vadd.f32 %v1507, %v1602
      %1604 = vmatmul.bf16.gmra.mxu0 %v1543
      %v1605 = vpop.f32.mrf.mxu0
      %v1606 = vadd.f32 %v1507, %v1605
      %v1607 = vpop.f32.mrf.mxu0
      %v1608 = vadd.f32 %v1507, %v1607
      %1609 = vmatmul.bf16.gmra.mxu0 %v1546
      %v1610 = vpop.f32.mrf.mxu0
      %v1611 = vadd.f32 %v1507, %v1610
      %v1612 = vpop.f32.mrf.mxu0
      %v1613 = vadd.f32 %v1507, %v1612
      %1614 = vmatmul.bf16.gmra.mxu0 %v1549
      %v1615 = vpop.f32.mrf.mxu0
      %v1616 = vadd.f32 %v1507, %v1615
      %v1617 = vpop.f32.mrf.mxu0
      %v1618 = vadd.f32 %v1507, %v1617
      %1619 = vmatmul.bf16.gmra.mxu0 %v1552
      %v1620 = vpop.f32.mrf.mxu0
      %v1621 = vadd.f32 %v1507, %v1620
      %v1622 = vpop.f32.mrf.mxu0
      %v1623 = vadd.f32 %v1507, %v1622
      %1624 = vmatmul.bf16.gmra.mxu0 %v1555
      %v1625 = vpop.f32.mrf.mxu0
      %v1626 = vadd.f32 %v1507, %v1625
      %v1627 = vpop.f32.mrf.mxu0
      %v1628 = vadd.f32 %v1507, %v1627
      %1629 = vmatmul.bf16.gmra.mxu0 %v1558
      %v1630 = vpop.f32.mrf.mxu0
      %v1631 = vadd.f32 %v1507, %v1630
      %v1632 = vpop.f32.mrf.mxu0
      %v1633 = vadd.f32 %v1507, %v1632
      %1634 = vmatmul.bf16.gmra.mxu0 %v1561
      %v1635 = vpop.f32.mrf.mxu0
      %v1636 = vadd.f32 %v1507, %v1635
      %v1637 = vpop.f32.mrf.mxu0
      %v1638 = vadd.f32 %v1507, %v1637
      %1639 = vmatmul.bf16.gmra.mxu0 %v1564
      %v1640 = vpop.f32.mrf.mxu0
      %v1641 = vadd.f32 %v1507, %v1640
      %v1642 = vpop.f32.mrf.mxu0
      %v1643 = vadd.f32 %v1507, %v1642
      %1644 = vmatmul.bf16.gmra.mxu0 %v1567
      %v1645 = vpop.f32.mrf.mxu0
      %v1646 = vadd.f32 %v1507, %v1645
      %v1647 = vpop.f32.mrf.mxu0
      %v1648 = vadd.f32 %v1507, %v1647
      %1649 = vmatmul.bf16.gmra.mxu0 %v1570
      %v1650 = vpop.f32.mrf.mxu0
      %v1651 = vadd.f32 %v1507, %v1650
      %v1652 = vpop.f32.mrf.mxu0
      %v1653 = vadd.f32 %v1507, %v1652
      %1654 = vmatmul.bf16.gmra.mxu0 %v1573
      %v1655 = vpop.f32.mrf.mxu0
      %v1656 = vadd.f32 %v1507, %v1655
      %v1657 = vpop.f32.mrf.mxu0
      %v1658 = vadd.f32 %v1507, %v1657
      %1659 = vmatmul.bf16.gmra.mxu0 %v1576
      %v1660 = vpop.f32.mrf.mxu0
      %v1661 = vadd.f32 %v1507, %v1660
      %v1662 = vpop.f32.mrf.mxu0
      %v1663 = vadd.f32 %v1507, %v1662
      %1664 = vmatmul.bf16.gmra.mxu0 %v1579
      %v1665 = vpop.f32.mrf.mxu0
      %v1666 = vadd.f32 %v1507, %v1665
      %v1667 = vpop.f32.mrf.mxu0
      %v1668 = vadd.f32 %v1507, %v1667
      %1669 = vdwg.mxu0
      %v1670 = vmax.f32 %v1591, 0.0
      %v1671 = vmax.f32 %v1593, 0.0
      %v1672 = vmax.f32 %v1596, 0.0
      %v1673 = vmax.f32 %v1598, 0.0
      %v1674 = vmax.f32 %v1601, 0.0
      %v1675 = vmax.f32 %v1603, 0.0
      %v1676 = vmax.f32 %v1606, 0.0
      %v1677 = vmax.f32 %v1608, 0.0
      %v1678 = vmax.f32 %v1611, 0.0
      %v1679 = vmax.f32 %v1613, 0.0
      %v1680 = vmax.f32 %v1616, 0.0
      %v1681 = vmax.f32 %v1618, 0.0
      %v1682 = vmax.f32 %v1621, 0.0
      %v1683 = vmax.f32 %v1623, 0.0
      %v1684 = vmax.f32 %v1626, 0.0
      %v1685 = vmax.f32 %v1628, 0.0
      %v1686 = vmax.f32 %v1631, 0.0
      %v1687 = vmax.f32 %v1633, 0.0
      %v1688 = vmax.f32 %v1636, 0.0
      %v1689 = vmax.f32 %v1638, 0.0
      %v1690 = vmax.f32 %v1641, 0.0
      %v1691 = vmax.f32 %v1643, 0.0
      %v1692 = vmax.f32 %v1646, 0.0
      %v1693 = vmax.f32 %v1648, 0.0
      %v1694 = vmax.f32 %v1651, 0.0
      %v1695 = vmax.f32 %v1653, 0.0
      %v1696 = vmax.f32 %v1656, 0.0
      %v1697 = vmax.f32 %v1658, 0.0
      %v1698 = vmax.f32 %v1661, 0.0
      %v1699 = vmax.f32 %v1663, 0.0
      %v1700 = vmax.f32 %v1666, 0.0
      %v1701 = vmax.f32 %v1668, 0.0
      %v1702 = vpack.c.bf16 %v1671, %v1670
      %v1703 = vpack.c.bf16 %v1673, %v1672
      %v1704 = vpack.c.bf16 %v1675, %v1674
      %v1705 = vpack.c.bf16 %v1677, %v1676
      %v1706 = vpack.c.bf16 %v1679, %v1678
      %v1707 = vpack.c.bf16 %v1681, %v1680
      %v1708 = vpack.c.bf16 %v1683, %v1682
      %v1709 = vpack.c.bf16 %v1685, %v1684
      %v1710 = vpack.c.bf16 %v1687, %v1686
      %v1711 = vpack.c.bf16 %v1689, %v1688
      %v1712 = vpack.c.bf16 %v1691, %v1690
      %v1713 = vpack.c.bf16 %v1693, %v1692
      %v1714 = vpack.c.bf16 %v1695, %v1694
      %v1715 = vpack.c.bf16 %v1697, %v1696
      %v1716 = vpack.c.bf16 %v1699, %v1698
      %v1717 = vpack.c.bf16 %v1701, %v1700
      %s1718 = scalar_lea.vmem %s3, 128
      %v1719 = vld [vmem:[%s1718] sm:$0xf]
      %v1720 = vld [vmem:[%s1718 + $0x4] sm:$0xf]
      %v1721 = vld [vmem:[%s1718 + $0x8] sm:$0xf]
      %v1722 = vld [vmem:[%s1718 + $0xc] sm:$0xf]
      %v1723 = vld [vmem:[%s1718 + $0x10] sm:$0xf]
      %v1724 = vld [vmem:[%s1718 + $0x14] sm:$0xf]
      %v1725 = vld [vmem:[%s1718 + $0x18] sm:$0xf]
      %v1726 = vld [vmem:[%s1718 + $0x1c] sm:$0xf]
      %s1727 = scalar_lea.vmem %s4, 4
      %v1728 = vld [vmem:[%s1727] sm:$0x1]
      %v1730 = vperm.slane %v1728, 0
      %v1740 = vunpack.c.l.b16 %v1719
      %v1741 = vunpack.c.l.b16 %v1720
      %v1742 = vunpack.c.l.b16 %v1721
      %v1743 = vunpack.c.l.b16 %v1722
      %v1744 = vunpack.c.l.b16 %v1723
      %v1745 = vunpack.c.l.b16 %v1724
      %v1746 = vunpack.c.l.b16 %v1725
      %v1747 = vunpack.c.l.b16 %v1726
      %v1748 = vpack.c.b16 %v1741, %v1740
      %v1749 = vpack.c.b16 %v1743, %v1742
      %v1750 = vpack.c.b16 %v1745, %v1744
      %v1751 = vpack.c.b16 %v1747, %v1746
      %v1757 = vsel %vm863, %v1702, 0
      %v1760 = vsel %vm863, %v1703, 0
      %v1763 = vsel %vm863, %v1704, 0
      %v1766 = vsel %vm863, %v1705, 0
      %v1769 = vsel %vm863, %v1706, 0
      %v1772 = vsel %vm863, %v1707, 0
      %v1775 = vsel %vm863, %v1708, 0
      %v1778 = vsel %vm863, %v1709, 0
      %v1781 = vsel %vm863, %v1710, 0
      %v1784 = vsel %vm863, %v1711, 0
      %v1787 = vsel %vm863, %v1712, 0
      %v1790 = vsel %vm863, %v1713, 0
      %v1793 = vsel %vm863, %v1714, 0
      %v1796 = vsel %vm863, %v1715, 0
      %v1799 = vsel %vm863, %v1716, 0
      %v1802 = vsel %vm863, %v1717, 0
      %1804 = vmatpush.bf16.msra.mxu0 0
      %1805 = vmatpush.bf16.msra.mxu0 0
      %1806 = vmatpush.bf16.msra.mxu0 0
      %1807 = vmatpush.bf16.msra.mxu0 0
      %1808 = vmatpush.bf16.msra.mxu0 %v1751
      %1809 = vmatpush.bf16.msra.mxu0 %v1750
      %1810 = vmatpush.bf16.msra.mxu0 %v1749
      %1811 = vmatpush.bf16.msra.mxu0 %v1748
      %1812 = vmatmul.bf16.gmra.mxu0 %v1757
      %v1813 = vpop.f32.mrf.mxu0
      %v1814 = vadd.f32 %v1730, %v1813
      %v1815 = vpop.f32.mrf.mxu0
      %v1816 = vadd.f32 %v1730, %v1815
      %1817 = vmatmul.bf16.gmra.mxu0 %v1760
      %v1818 = vpop.f32.mrf.mxu0
      %v1819 = vadd.f32 %v1730, %v1818
      %v1820 = vpop.f32.mrf.mxu0
      %v1821 = vadd.f32 %v1730, %v1820
      %1822 = vmatmul.bf16.gmra.mxu0 %v1763
      %v1823 = vpop.f32.mrf.mxu0
      %v1824 = vadd.f32 %v1730, %v1823
      %v1825 = vpop.f32.mrf.mxu0
      %v1826 = vadd.f32 %v1730, %v1825
      %1827 = vmatmul.bf16.gmra.mxu0 %v1766
      %v1828 = vpop.f32.mrf.mxu0
      %v1829 = vadd.f32 %v1730, %v1828
      %v1830 = vpop.f32.mrf.mxu0
      %v1831 = vadd.f32 %v1730, %v1830
      %1832 = vmatmul.bf16.gmra.mxu0 %v1769
      %v1833 = vpop.f32.mrf.mxu0
      %v1834 = vadd.f32 %v1730, %v1833
      %v1835 = vpop.f32.mrf.mxu0
      %v1836 = vadd.f32 %v1730, %v1835
      %1837 = vmatmul.bf16.gmra.mxu0 %v1772
      %v1838 = vpop.f32.mrf.mxu0
      %v1839 = vadd.f32 %v1730, %v1838
      %v1840 = vpop.f32.mrf.mxu0
      %v1841 = vadd.f32 %v1730, %v1840
      %1842 = vmatmul.bf16.gmra.mxu0 %v1775
      %v1843 = vpop.f32.mrf.mxu0
      %v1844 = vadd.f32 %v1730, %v1843
      %v1845 = vpop.f32.mrf.mxu0
      %v1846 = vadd.f32 %v1730, %v1845
      %1847 = vmatmul.bf16.gmra.mxu0 %v1778
      %v1848 = vpop.f32.mrf.mxu0
      %v1849 = vadd.f32 %v1730, %v1848
      %v1850 = vpop.f32.mrf.mxu0
      %v1851 = vadd.f32 %v1730, %v1850
      %1852 = vmatmul.bf16.gmra.mxu0 %v1781
      %v1853 = vpop.f32.mrf.mxu0
      %v1854 = vadd.f32 %v1730, %v1853
      %v1855 = vpop.f32.mrf.mxu0
      %v1856 = vadd.f32 %v1730, %v1855
      %1857 = vmatmul.bf16.gmra.mxu0 %v1784
      %v1858 = vpop.f32.mrf.mxu0
      %v1859 = vadd.f32 %v1730, %v1858
      %v1860 = vpop.f32.mrf.mxu0
      %v1861 = vadd.f32 %v1730, %v1860
      %1862 = vmatmul.bf16.gmra.mxu0 %v1787
      %v1863 = vpop.f32.mrf.mxu0
      %v1864 = vadd.f32 %v1730, %v1863
      %v1865 = vpop.f32.mrf.mxu0
      %v1866 = vadd.f32 %v1730, %v1865
      %1867 = vmatmul.bf16.gmra.mxu0 %v1790
      %v1868 = vpop.f32.mrf.mxu0
      %v1869 = vadd.f32 %v1730, %v1868
      %v1870 = vpop.f32.mrf.mxu0
      %v1871 = vadd.f32 %v1730, %v1870
      %1872 = vmatmul.bf16.gmra.mxu0 %v1793
      %v1873 = vpop.f32.mrf.mxu0
      %v1874 = vadd.f32 %v1730, %v1873
      %v1875 = vpop.f32.mrf.mxu0
      %v1876 = vadd.f32 %v1730, %v1875
      %1877 = vmatmul.bf16.gmra.mxu0 %v1796
      %v1878 = vpop.f32.mrf.mxu0
      %v1879 = vadd.f32 %v1730, %v1878
      %v1880 = vpop.f32.mrf.mxu0
      %v1881 = vadd.f32 %v1730, %v1880
      %1882 = vmatmul.bf16.gmra.mxu0 %v1799
      %v1883 = vpop.f32.mrf.mxu0
      %v1884 = vadd.f32 %v1730, %v1883
      %v1885 = vpop.f32.mrf.mxu0
      %v1886 = vadd.f32 %v1730, %v1885
      %1887 = vmatmul.bf16.gmra.mxu0 %v1802
      %v1888 = vpop.f32.mrf.mxu0
      %v1889 = vadd.f32 %v1730, %v1888
      %v1890 = vpop.f32.mrf.mxu0
      %v1891 = vadd.f32 %v1730, %v1890
      %1892 = vdwg.mxu0
      %v1893 = vmax.f32 %v1814, 0.0
      %v1894 = vmax.f32 %v1816, 0.0
      %v1895 = vmax.f32 %v1819, 0.0
      %v1896 = vmax.f32 %v1821, 0.0
      %v1897 = vmax.f32 %v1824, 0.0
      %v1898 = vmax.f32 %v1826, 0.0
      %v1899 = vmax.f32 %v1829, 0.0
      %v1900 = vmax.f32 %v1831, 0.0
      %v1901 = vmax.f32 %v1834, 0.0
      %v1902 = vmax.f32 %v1836, 0.0
      %v1903 = vmax.f32 %v1839, 0.0
      %v1904 = vmax.f32 %v1841, 0.0
      %v1905 = vmax.f32 %v1844, 0.0
      %v1906 = vmax.f32 %v1846, 0.0
      %v1907 = vmax.f32 %v1849, 0.0
      %v1908 = vmax.f32 %v1851, 0.0
      %v1909 = vmax.f32 %v1854, 0.0
      %v1910 = vmax.f32 %v1856, 0.0
      %v1911 = vmax.f32 %v1859, 0.0
      %v1912 = vmax.f32 %v1861, 0.0
      %v1913 = vmax.f32 %v1864, 0.0
      %v1914 = vmax.f32 %v1866, 0.0
      %v1915 = vmax.f32 %v1869, 0.0
      %v1916 = vmax.f32 %v1871, 0.0
      %v1917 = vmax.f32 %v1874, 0.0
      %v1918 = vmax.f32 %v1876, 0.0
      %v1919 = vmax.f32 %v1879, 0.0
      %v1920 = vmax.f32 %v1881, 0.0
      %v1921 = vmax.f32 %v1884, 0.0
      %v1922 = vmax.f32 %v1886, 0.0
      %v1923 = vmax.f32 %v1889, 0.0
      %v1924 = vmax.f32 %v1891, 0.0
      %v1925 = vld [vmem:[%s5] sm:$0x1]
      %v1927 = vperm.slane %v1925, 0
      %v1929 = vmul.f32 %v1893, %v1927
      %v1930 = vmul.f32 %v1894, %v1927
      %v1931 = vmul.f32 %v1895, %v1927
      %v1932 = vmul.f32 %v1896, %v1927
      %v1933 = vmul.f32 %v1897, %v1927
      %v1934 = vmul.f32 %v1898, %v1927
      %v1935 = vmul.f32 %v1899, %v1927
      %v1936 = vmul.f32 %v1900, %v1927
      %v1937 = vmul.f32 %v1901, %v1927
      %v1938 = vmul.f32 %v1902, %v1927
      %v1939 = vmul.f32 %v1903, %v1927
      %v1940 = vmul.f32 %v1904, %v1927
      %v1941 = vmul.f32 %v1905, %v1927
      %v1942 = vmul.f32 %v1906, %v1927
      %v1943 = vmul.f32 %v1907, %v1927
      %v1944 = vmul.f32 %v1908, %v1927
      %v1945 = vmul.f32 %v1909, %v1927
      %v1946 = vmul.f32 %v1910, %v1927
      %v1947 = vmul.f32 %v1911, %v1927
      %v1948 = vmul.f32 %v1912, %v1927
      %v1949 = vmul.f32 %v1913, %v1927
      %v1950 = vmul.f32 %v1914, %v1927
      %v1951 = vmul.f32 %v1915, %v1927
      %v1952 = vmul.f32 %v1916, %v1927
      %v1953 = vmul.f32 %v1917, %v1927
      %v1954 = vmul.f32 %v1918, %v1927
      %v1955 = vmul.f32 %v1919, %v1927
      %v1956 = vmul.f32 %v1920, %v1927
      %v1957 = vmul.f32 %v1921, %v1927
      %v1958 = vmul.f32 %v1922, %v1927
      %v1959 = vmul.f32 %v1923, %v1927
      %v1960 = vmul.f32 %v1924, %v1927
      %v1961 = vsel %vm863, %v1929, 0.0
      %1962 = vadd.xlane.f32.xlu0 %v1961
      %v1963 = vpop.xlane.xlu0 %1962
      %v1964 = vsel %vm863, %v1930, 0.0
      %1965 = vadd.xlane.f32.xlu0 %v1964
      %v1966 = vpop.xlane.xlu0 %1965
      %v1967 = vsel %vm863, %v1931, 0.0
      %1968 = vadd.xlane.f32.xlu0 %v1967
      %v1969 = vpop.xlane.xlu0 %1968
      %v1970 = vsel %vm863, %v1932, 0.0
      %1971 = vadd.xlane.f32.xlu0 %v1970
      %v1972 = vpop.xlane.xlu0 %1971
      %v1973 = vsel %vm863, %v1933, 0.0
      %1974 = vadd.xlane.f32.xlu0 %v1973
      %v1975 = vpop.xlane.xlu0 %1974
      %v1976 = vsel %vm863, %v1934, 0.0
      %1977 = vadd.xlane.f32.xlu0 %v1976
      %v1978 = vpop.xlane.xlu0 %1977
      %v1979 = vsel %vm863, %v1935, 0.0
      %1980 = vadd.xlane.f32.xlu0 %v1979
      %v1981 = vpop.xlane.xlu0 %1980
      %v1982 = vsel %vm863, %v1936, 0.0
      %1983 = vadd.xlane.f32.xlu0 %v1982
      %v1984 = vpop.xlane.xlu0 %1983
      %v1985 = vsel %vm863, %v1937, 0.0
      %1986 = vadd.xlane.f32.xlu0 %v1985
      %v1987 = vpop.xlane.xlu0 %1986
      %v1988 = vsel %vm863, %v1938, 0.0
      %1989 = vadd.xlane.f32.xlu0 %v1988
      %v1990 = vpop.xlane.xlu0 %1989
      %v1991 = vsel %vm863, %v1939, 0.0
      %1992 = vadd.xlane.f32.xlu0 %v1991
      %v1993 = vpop.xlane.xlu0 %1992
      %v1994 = vsel %vm863, %v1940, 0.0
      %1995 = vadd.xlane.f32.xlu0 %v1994
      %v1996 = vpop.xlane.xlu0 %1995
      %v1997 = vsel %vm863, %v1941, 0.0
      %1998 = vadd.xlane.f32.xlu0 %v1997
      %v1999 = vpop.xlane.xlu0 %1998
      %v2000 = vsel %vm863, %v1942, 0.0
      %2001 = vadd.xlane.f32.xlu0 %v2000
      %v2002 = vpop.xlane.xlu0 %2001
      %v2003 = vsel %vm863, %v1943, 0.0
      %2004 = vadd.xlane.f32.xlu0 %v2003
      %v2005 = vpop.xlane.xlu0 %2004
      %v2006 = vsel %vm863, %v1944, 0.0
      %2007 = vadd.xlane.f32.xlu0 %v2006
      %v2008 = vpop.xlane.xlu0 %2007
      %v2009 = vsel %vm863, %v1945, 0.0
      %2010 = vadd.xlane.f32.xlu0 %v2009
      %v2011 = vpop.xlane.xlu0 %2010
      %v2012 = vsel %vm863, %v1946, 0.0
      %2013 = vadd.xlane.f32.xlu0 %v2012
      %v2014 = vpop.xlane.xlu0 %2013
      %v2015 = vsel %vm863, %v1947, 0.0
      %2016 = vadd.xlane.f32.xlu0 %v2015
      %v2017 = vpop.xlane.xlu0 %2016
      %v2018 = vsel %vm863, %v1948, 0.0
      %2019 = vadd.xlane.f32.xlu0 %v2018
      %v2020 = vpop.xlane.xlu0 %2019
      %v2021 = vsel %vm863, %v1949, 0.0
      %2022 = vadd.xlane.f32.xlu0 %v2021
      %v2023 = vpop.xlane.xlu0 %2022
      %v2024 = vsel %vm863, %v1950, 0.0
      %2025 = vadd.xlane.f32.xlu0 %v2024
      %v2026 = vpop.xlane.xlu0 %2025
      %v2027 = vsel %vm863, %v1951, 0.0
      %2028 = vadd.xlane.f32.xlu0 %v2027
      %v2029 = vpop.xlane.xlu0 %2028
      %v2030 = vsel %vm863, %v1952, 0.0
      %2031 = vadd.xlane.f32.xlu0 %v2030
      %v2032 = vpop.xlane.xlu0 %2031
      %v2033 = vsel %vm863, %v1953, 0.0
      %2034 = vadd.xlane.f32.xlu0 %v2033
      %v2035 = vpop.xlane.xlu0 %2034
      %v2036 = vsel %vm863, %v1954, 0.0
      %2037 = vadd.xlane.f32.xlu0 %v2036
      %v2038 = vpop.xlane.xlu0 %2037
      %v2039 = vsel %vm863, %v1955, 0.0
      %2040 = vadd.xlane.f32.xlu0 %v2039
      %v2041 = vpop.xlane.xlu0 %2040
      %v2042 = vsel %vm863, %v1956, 0.0
      %2043 = vadd.xlane.f32.xlu0 %v2042
      %v2044 = vpop.xlane.xlu0 %2043
      %v2045 = vsel %vm863, %v1957, 0.0
      %2046 = vadd.xlane.f32.xlu0 %v2045
      %v2047 = vpop.xlane.xlu0 %2046
      %v2048 = vsel %vm863, %v1958, 0.0
      %2049 = vadd.xlane.f32.xlu0 %v2048
      %v2050 = vpop.xlane.xlu0 %2049
      %v2051 = vsel %vm863, %v1959, 0.0
      %2052 = vadd.xlane.f32.xlu0 %v2051
      %v2053 = vpop.xlane.xlu0 %2052
      %v2054 = vsel %vm863, %v1960, 0.0
      %2055 = vadd.xlane.f32.xlu0 %v2054
      %v2056 = vpop.xlane.xlu0 %2055
      %v2057 = vld [vmem:[#allocation2] sm:$0x1]
      %v2059 = vperm.slane %v2057, 0
      %2060 = vset.pattern.permute.xlu0 0
      %2061 = vperm.xlu0 %2060, %v2059
      %v2062 = vpop.permute.xlu0 %2061
      %v2064 = vadd.f32 %v1963, %v2062
      %v2065 = vadd.f32 %v1966, %v2062
      %v2066 = vadd.f32 %v1969, %v2062
      %v2067 = vadd.f32 %v1972, %v2062
      %v2068 = vadd.f32 %v1975, %v2062
      %v2069 = vadd.f32 %v1978, %v2062
      %v2070 = vadd.f32 %v1981, %v2062
      %v2071 = vadd.f32 %v1984, %v2062
      %v2072 = vadd.f32 %v1987, %v2062
      %v2073 = vadd.f32 %v1990, %v2062
      %v2074 = vadd.f32 %v1993, %v2062
      %v2075 = vadd.f32 %v1996, %v2062
      %v2076 = vadd.f32 %v1999, %v2062
      %v2077 = vadd.f32 %v2002, %v2062
      %v2078 = vadd.f32 %v2005, %v2062
      %v2079 = vadd.f32 %v2008, %v2062
      %v2080 = vadd.f32 %v2011, %v2062
      %v2081 = vadd.f32 %v2014, %v2062
      %v2082 = vadd.f32 %v2017, %v2062
      %v2083 = vadd.f32 %v2020, %v2062
      %v2084 = vadd.f32 %v2023, %v2062
      %v2085 = vadd.f32 %v2026, %v2062
      %v2086 = vadd.f32 %v2029, %v2062
      %v2087 = vadd.f32 %v2032, %v2062
      %v2088 = vadd.f32 %v2035, %v2062
      %v2089 = vadd.f32 %v2038, %v2062
      %v2090 = vadd.f32 %v2041, %v2062
      %v2091 = vadd.f32 %v2044, %v2062
      %v2092 = vadd.f32 %v2047, %v2062
      %v2093 = vadd.f32 %v2050, %v2062
      %v2094 = vadd.f32 %v2053, %v2062
      %v2095 = vadd.f32 %v2056, %v2062
      %v2096 = vsub.f32 0.0, %v2064
      %v2097 = vsub.f32 0.0, %v2065
      %v2098 = vsub.f32 0.0, %v2066
      %v2099 = vsub.f32 0.0, %v2067
      %v2100 = vsub.f32 0.0, %v2068
      %v2101 = vsub.f32 0.0, %v2069
      %v2102 = vsub.f32 0.0, %v2070
      %v2103 = vsub.f32 0.0, %v2071
      %v2104 = vsub.f32 0.0, %v2072
      %v2105 = vsub.f32 0.0, %v2073
      %v2106 = vsub.f32 0.0, %v2074
      %v2107 = vsub.f32 0.0, %v2075
      %v2108 = vsub.f32 0.0, %v2076
      %v2109 = vsub.f32 0.0, %v2077
      %v2110 = vsub.f32 0.0, %v2078
      %v2111 = vsub.f32 0.0, %v2079
      %v2112 = vsub.f32 0.0, %v2080
      %v2113 = vsub.f32 0.0, %v2081
      %v2114 = vsub.f32 0.0, %v2082
      %v2115 = vsub.f32 0.0, %v2083
      %v2116 = vsub.f32 0.0, %v2084
      %v2117 = vsub.f32 0.0, %v2085
      %v2118 = vsub.f32 0.0, %v2086
      %v2119 = vsub.f32 0.0, %v2087
      %v2120 = vsub.f32 0.0, %v2088
      %v2121 = vsub.f32 0.0, %v2089
      %v2122 = vsub.f32 0.0, %v2090
      %v2123 = vsub.f32 0.0, %v2091
      %v2124 = vsub.f32 0.0, %v2092
      %v2125 = vsub.f32 0.0, %v2093
      %v2126 = vsub.f32 0.0, %v2094
      %v2127 = vsub.f32 0.0, %v2095
      %v2128 = vmul.f32 %v2096, 1.442695
      %v2129 = vpow.pop %v2128
      %v2130 = vmul.f32 %v2097, 1.442695
      %v2131 = vpow.pop %v2130
      %v2132 = vmul.f32 %v2098, 1.442695
      %v2133 = vpow.pop %v2132
      %v2134 = vmul.f32 %v2099, 1.442695
      %v2135 = vpow.pop %v2134
      %v2136 = vmul.f32 %v2100, 1.442695
      %v2137 = vpow.pop %v2136
      %v2138 = vmul.f32 %v2101, 1.442695
      %v2139 = vpow.pop %v2138
      %v2140 = vmul.f32 %v2102, 1.442695
      %v2141 = vpow.pop %v2140
      %v2142 = vmul.f32 %v2103, 1.442695
      %v2143 = vpow.pop %v2142
      %v2144 = vmul.f32 %v2104, 1.442695
      %v2145 = vpow.pop %v2144
      %v2146 = vmul.f32 %v2105, 1.442695
      %v2147 = vpow.pop %v2146
      %v2148 = vmul.f32 %v2106, 1.442695
      %v2149 = vpow.pop %v2148
      %v2150 = vmul.f32 %v2107, 1.442695
      %v2151 = vpow.pop %v2150
      %v2152 = vmul.f32 %v2108, 1.442695
      %v2153 = vpow.pop %v2152
      %v2154 = vmul.f32 %v2109, 1.442695
      %v2155 = vpow.pop %v2154
      %v2156 = vmul.f32 %v2110, 1.442695
      %v2157 = vpow.pop %v2156
      %v2158 = vmul.f32 %v2111, 1.442695
      %v2159 = vpow.pop %v2158
      %v2160 = vmul.f32 %v2112, 1.442695
      %v2161 = vpow.pop %v2160
      %v2162 = vmul.f32 %v2113, 1.442695
      %v2163 = vpow.pop %v2162
      %v2164 = vmul.f32 %v2114, 1.442695
      %v2165 = vpow.pop %v2164
      %v2166 = vmul.f32 %v2115, 1.442695
      %v2167 = vpow.pop %v2166
      %v2168 = vmul.f32 %v2116, 1.442695
      %v2169 = vpow.pop %v2168
      %v2170 = vmul.f32 %v2117, 1.442695
      %v2171 = vpow.pop %v2170
      %v2172 = vmul.f32 %v2118, 1.442695
      %v2173 = vpow.pop %v2172
      %v2174 = vmul.f32 %v2119, 1.442695
      %v2175 = vpow.pop %v2174
      %v2176 = vmul.f32 %v2120, 1.442695
      %v2177 = vpow.pop %v2176
      %v2178 = vmul.f32 %v2121, 1.442695
      %v2179 = vpow.pop %v2178
      %v2180 = vmul.f32 %v2122, 1.442695
      %v2181 = vpow.pop %v2180
      %v2182 = vmul.f32 %v2123, 1.442695
      %v2183 = vpow.pop %v2182
      %v2184 = vmul.f32 %v2124, 1.442695
      %v2185 = vpow.pop %v2184
      %v2186 = vmul.f32 %v2125, 1.442695
      %v2187 = vpow.pop %v2186
      %v2188 = vmul.f32 %v2126, 1.442695
      %v2189 = vpow.pop %v2188
      %v2190 = vmul.f32 %v2127, 1.442695
      %v2191 = vpow.pop %v2190
      %v2192 = vadd.f32 %v2129, 1.0
      %v2193 = vadd.f32 %v2131, 1.0
      %v2194 = vadd.f32 %v2133, 1.0
      %v2195 = vadd.f32 %v2135, 1.0
      %v2196 = vadd.f32 %v2137, 1.0
      %v2197 = vadd.f32 %v2139, 1.0
      %v2198 = vadd.f32 %v2141, 1.0
      %v2199 = vadd.f32 %v2143, 1.0
      %v2200 = vadd.f32 %v2145, 1.0
      %v2201 = vadd.f32 %v2147, 1.0
      %v2202 = vadd.f32 %v2149, 1.0
      %v2203 = vadd.f32 %v2151, 1.0
      %v2204 = vadd.f32 %v2153, 1.0
      %v2205 = vadd.f32 %v2155, 1.0
      %v2206 = vadd.f32 %v2157, 1.0
      %v2207 = vadd.f32 %v2159, 1.0
      %v2208 = vadd.f32 %v2161, 1.0
      %v2209 = vadd.f32 %v2163, 1.0
      %v2210 = vadd.f32 %v2165, 1.0
      %v2211 = vadd.f32 %v2167, 1.0
      %v2212 = vadd.f32 %v2169, 1.0
      %v2213 = vadd.f32 %v2171, 1.0
      %v2214 = vadd.f32 %v2173, 1.0
      %v2215 = vadd.f32 %v2175, 1.0
      %v2216 = vadd.f32 %v2177, 1.0
      %v2217 = vadd.f32 %v2179, 1.0
      %v2218 = vadd.f32 %v2181, 1.0
      %v2219 = vadd.f32 %v2183, 1.0
      %v2220 = vadd.f32 %v2185, 1.0
      %v2221 = vadd.f32 %v2187, 1.0
      %v2222 = vadd.f32 %v2189, 1.0
      %v2223 = vadd.f32 %v2191, 1.0
      %v2224 = vrcp.pop %v2192
      %v2225 = vmul.f32 %v2192, %v2224
      %v2226 = vsub.f32 1.0, %v2225
      %v2227 = vmul.f32 %v2224, %v2226
      %v2228 = vadd.f32 %v2224, %v2227
      %vm2229 = vweird.f32 %v2192
      %vm2230 = vweird.f32 %v2224
      %vm2231 = vmor %vm2229, %vm2230
      %v2232 = vsel %vm2231, %v2224, %v2228
      %v2233 = vand.u32 2147483647, %v2192
      %vm2234 = vcmp.eq.f32.partialorder %v2233, 8.507059e+37
      %v2235 = vand.u32 %v2192, 2147483648
      %v2236 = vor.u32 1.1754944e-38, %v2235
      %v2237 = vsel %vm2234, %v2236, %v2232
      %v2238 = vmul.f32 1.0, %v2237
      %v2239 = vrcp.pop %v2193
      %v2240 = vmul.f32 %v2193, %v2239
      %v2241 = vsub.f32 1.0, %v2240
      %v2242 = vmul.f32 %v2239, %v2241
      %v2243 = vadd.f32 %v2239, %v2242
      %vm2244 = vweird.f32 %v2193
      %vm2245 = vweird.f32 %v2239
      %vm2246 = vmor %vm2244, %vm2245
      %v2247 = vsel %vm2246, %v2239, %v2243
      %v2248 = vand.u32 2147483647, %v2193
      %vm2249 = vcmp.eq.f32.partialorder %v2248, 8.507059e+37
      %v2250 = vand.u32 %v2193, 2147483648
      %v2251 = vor.u32 1.1754944e-38, %v2250
      %v2252 = vsel %vm2249, %v2251, %v2247
      %v2253 = vmul.f32 1.0, %v2252
      %v2254 = vrcp.pop %v2194
      %v2255 = vmul.f32 %v2194, %v2254
      %v2256 = vsub.f32 1.0, %v2255
      %v2257 = vmul.f32 %v2254, %v2256
      %v2258 = vadd.f32 %v2254, %v2257
      %vm2259 = vweird.f32 %v2194
      %vm2260 = vweird.f32 %v2254
      %vm2261 = vmor %vm2259, %vm2260
      %v2262 = vsel %vm2261, %v2254, %v2258
      %v2263 = vand.u32 2147483647, %v2194
      %vm2264 = vcmp.eq.f32.partialorder %v2263, 8.507059e+37
      %v2265 = vand.u32 %v2194, 2147483648
      %v2266 = vor.u32 1.1754944e-38, %v2265
      %v2267 = vsel %vm2264, %v2266, %v2262
      %v2268 = vmul.f32 1.0, %v2267
      %v2269 = vrcp.pop %v2195
      %v2270 = vmul.f32 %v2195, %v2269
      %v2271 = vsub.f32 1.0, %v2270
      %v2272 = vmul.f32 %v2269, %v2271
      %v2273 = vadd.f32 %v2269, %v2272
      %vm2274 = vweird.f32 %v2195
      %vm2275 = vweird.f32 %v2269
      %vm2276 = vmor %vm2274, %vm2275
      %v2277 = vsel %vm2276, %v2269, %v2273
      %v2278 = vand.u32 2147483647, %v2195
      %vm2279 = vcmp.eq.f32.partialorder %v2278, 8.507059e+37
      %v2280 = vand.u32 %v2195, 2147483648
      %v2281 = vor.u32 1.1754944e-38, %v2280
      %v2282 = vsel %vm2279, %v2281, %v2277
      %v2283 = vmul.f32 1.0, %v2282
      %v2284 = vrcp.pop %v2196
      %v2285 = vmul.f32 %v2196, %v2284
      %v2286 = vsub.f32 1.0, %v2285
      %v2287 = vmul.f32 %v2284, %v2286
      %v2288 = vadd.f32 %v2284, %v2287
      %vm2289 = vweird.f32 %v2196
      %vm2290 = vweird.f32 %v2284
      %vm2291 = vmor %vm2289, %vm2290
      %v2292 = vsel %vm2291, %v2284, %v2288
      %v2293 = vand.u32 2147483647, %v2196
      %vm2294 = vcmp.eq.f32.partialorder %v2293, 8.507059e+37
      %v2295 = vand.u32 %v2196, 2147483648
      %v2296 = vor.u32 1.1754944e-38, %v2295
      %v2297 = vsel %vm2294, %v2296, %v2292
      %v2298 = vmul.f32 1.0, %v2297
      %v2299 = vrcp.pop %v2197
      %v2300 = vmul.f32 %v2197, %v2299
      %v2301 = vsub.f32 1.0, %v2300
      %v2302 = vmul.f32 %v2299, %v2301
      %v2303 = vadd.f32 %v2299, %v2302
      %vm2304 = vweird.f32 %v2197
      %vm2305 = vweird.f32 %v2299
      %vm2306 = vmor %vm2304, %vm2305
      %v2307 = vsel %vm2306, %v2299, %v2303
      %v2308 = vand.u32 2147483647, %v2197
      %vm2309 = vcmp.eq.f32.partialorder %v2308, 8.507059e+37
      %v2310 = vand.u32 %v2197, 2147483648
      %v2311 = vor.u32 1.1754944e-38, %v2310
      %v2312 = vsel %vm2309, %v2311, %v2307
      %v2313 = vmul.f32 1.0, %v2312
      %v2314 = vrcp.pop %v2198
      %v2315 = vmul.f32 %v2198, %v2314
      %v2316 = vsub.f32 1.0, %v2315
      %v2317 = vmul.f32 %v2314, %v2316
      %v2318 = vadd.f32 %v2314, %v2317
      %vm2319 = vweird.f32 %v2198
      %vm2320 = vweird.f32 %v2314
      %vm2321 = vmor %vm2319, %vm2320
      %v2322 = vsel %vm2321, %v2314, %v2318
      %v2323 = vand.u32 2147483647, %v2198
      %vm2324 = vcmp.eq.f32.partialorder %v2323, 8.507059e+37
      %v2325 = vand.u32 %v2198, 2147483648
      %v2326 = vor.u32 1.1754944e-38, %v2325
      %v2327 = vsel %vm2324, %v2326, %v2322
      %v2328 = vmul.f32 1.0, %v2327
      %v2329 = vrcp.pop %v2199
      %v2330 = vmul.f32 %v2199, %v2329
      %v2331 = vsub.f32 1.0, %v2330
      %v2332 = vmul.f32 %v2329, %v2331
      %v2333 = vadd.f32 %v2329, %v2332
      %vm2334 = vweird.f32 %v2199
      %vm2335 = vweird.f32 %v2329
      %vm2336 = vmor %vm2334, %vm2335
      %v2337 = vsel %vm2336, %v2329, %v2333
      %v2338 = vand.u32 2147483647, %v2199
      %vm2339 = vcmp.eq.f32.partialorder %v2338, 8.507059e+37
      %v2340 = vand.u32 %v2199, 2147483648
      %v2341 = vor.u32 1.1754944e-38, %v2340
      %v2342 = vsel %vm2339, %v2341, %v2337
      %v2343 = vmul.f32 1.0, %v2342
      %v2344 = vrcp.pop %v2200
      %v2345 = vmul.f32 %v2200, %v2344
      %v2346 = vsub.f32 1.0, %v2345
      %v2347 = vmul.f32 %v2344, %v2346
      %v2348 = vadd.f32 %v2344, %v2347
      %vm2349 = vweird.f32 %v2200
      %vm2350 = vweird.f32 %v2344
      %vm2351 = vmor %vm2349, %vm2350
      %v2352 = vsel %vm2351, %v2344, %v2348
      %v2353 = vand.u32 2147483647, %v2200
      %vm2354 = vcmp.eq.f32.partialorder %v2353, 8.507059e+37
      %v2355 = vand.u32 %v2200, 2147483648
      %v2356 = vor.u32 1.1754944e-38, %v2355
      %v2357 = vsel %vm2354, %v2356, %v2352
      %v2358 = vmul.f32 1.0, %v2357
      %v2359 = vrcp.pop %v2201
      %v2360 = vmul.f32 %v2201, %v2359
      %v2361 = vsub.f32 1.0, %v2360
      %v2362 = vmul.f32 %v2359, %v2361
      %v2363 = vadd.f32 %v2359, %v2362
      %vm2364 = vweird.f32 %v2201
      %vm2365 = vweird.f32 %v2359
      %vm2366 = vmor %vm2364, %vm2365
      %v2367 = vsel %vm2366, %v2359, %v2363
      %v2368 = vand.u32 2147483647, %v2201
      %vm2369 = vcmp.eq.f32.partialorder %v2368, 8.507059e+37
      %v2370 = vand.u32 %v2201, 2147483648
      %v2371 = vor.u32 1.1754944e-38, %v2370
      %v2372 = vsel %vm2369, %v2371, %v2367
      %v2373 = vmul.f32 1.0, %v2372
      %v2374 = vrcp.pop %v2202
      %v2375 = vmul.f32 %v2202, %v2374
      %v2376 = vsub.f32 1.0, %v2375
      %v2377 = vmul.f32 %v2374, %v2376
      %v2378 = vadd.f32 %v2374, %v2377
      %vm2379 = vweird.f32 %v2202
      %vm2380 = vweird.f32 %v2374
      %vm2381 = vmor %vm2379, %vm2380
      %v2382 = vsel %vm2381, %v2374, %v2378
      %v2383 = vand.u32 2147483647, %v2202
      %vm2384 = vcmp.eq.f32.partialorder %v2383, 8.507059e+37
      %v2385 = vand.u32 %v2202, 2147483648
      %v2386 = vor.u32 1.1754944e-38, %v2385
      %v2387 = vsel %vm2384, %v2386, %v2382
      %v2388 = vmul.f32 1.0, %v2387
      %v2389 = vrcp.pop %v2203
      %v2390 = vmul.f32 %v2203, %v2389
      %v2391 = vsub.f32 1.0, %v2390
      %v2392 = vmul.f32 %v2389, %v2391
      %v2393 = vadd.f32 %v2389, %v2392
      %vm2394 = vweird.f32 %v2203
      %vm2395 = vweird.f32 %v2389
      %vm2396 = vmor %vm2394, %vm2395
      %v2397 = vsel %vm2396, %v2389, %v2393
      %v2398 = vand.u32 2147483647, %v2203
      %vm2399 = vcmp.eq.f32.partialorder %v2398, 8.507059e+37
      %v2400 = vand.u32 %v2203, 2147483648
      %v2401 = vor.u32 1.1754944e-38, %v2400
      %v2402 = vsel %vm2399, %v2401, %v2397
      %v2403 = vmul.f32 1.0, %v2402
      %v2404 = vrcp.pop %v2204
      %v2405 = vmul.f32 %v2204, %v2404
      %v2406 = vsub.f32 1.0, %v2405
      %v2407 = vmul.f32 %v2404, %v2406
      %v2408 = vadd.f32 %v2404, %v2407
      %vm2409 = vweird.f32 %v2204
      %vm2410 = vweird.f32 %v2404
      %vm2411 = vmor %vm2409, %vm2410
      %v2412 = vsel %vm2411, %v2404, %v2408
      %v2413 = vand.u32 2147483647, %v2204
      %vm2414 = vcmp.eq.f32.partialorder %v2413, 8.507059e+37
      %v2415 = vand.u32 %v2204, 2147483648
      %v2416 = vor.u32 1.1754944e-38, %v2415
      %v2417 = vsel %vm2414, %v2416, %v2412
      %v2418 = vmul.f32 1.0, %v2417
      %v2419 = vrcp.pop %v2205
      %v2420 = vmul.f32 %v2205, %v2419
      %v2421 = vsub.f32 1.0, %v2420
      %v2422 = vmul.f32 %v2419, %v2421
      %v2423 = vadd.f32 %v2419, %v2422
      %vm2424 = vweird.f32 %v2205
      %vm2425 = vweird.f32 %v2419
      %vm2426 = vmor %vm2424, %vm2425
      %v2427 = vsel %vm2426, %v2419, %v2423
      %v2428 = vand.u32 2147483647, %v2205
      %vm2429 = vcmp.eq.f32.partialorder %v2428, 8.507059e+37
      %v2430 = vand.u32 %v2205, 2147483648
      %v2431 = vor.u32 1.1754944e-38, %v2430
      %v2432 = vsel %vm2429, %v2431, %v2427
      %v2433 = vmul.f32 1.0, %v2432
      %v2434 = vrcp.pop %v2206
      %v2435 = vmul.f32 %v2206, %v2434
      %v2436 = vsub.f32 1.0, %v2435
      %v2437 = vmul.f32 %v2434, %v2436
      %v2438 = vadd.f32 %v2434, %v2437
      %vm2439 = vweird.f32 %v2206
      %vm2440 = vweird.f32 %v2434
      %vm2441 = vmor %vm2439, %vm2440
      %v2442 = vsel %vm2441, %v2434, %v2438
      %v2443 = vand.u32 2147483647, %v2206
      %vm2444 = vcmp.eq.f32.partialorder %v2443, 8.507059e+37
      %v2445 = vand.u32 %v2206, 2147483648
      %v2446 = vor.u32 1.1754944e-38, %v2445
      %v2447 = vsel %vm2444, %v2446, %v2442
      %v2448 = vmul.f32 1.0, %v2447
      %v2449 = vrcp.pop %v2207
      %v2450 = vmul.f32 %v2207, %v2449
      %v2451 = vsub.f32 1.0, %v2450
      %v2452 = vmul.f32 %v2449, %v2451
      %v2453 = vadd.f32 %v2449, %v2452
      %vm2454 = vweird.f32 %v2207
      %vm2455 = vweird.f32 %v2449
      %vm2456 = vmor %vm2454, %vm2455
      %v2457 = vsel %vm2456, %v2449, %v2453
      %v2458 = vand.u32 2147483647, %v2207
      %vm2459 = vcmp.eq.f32.partialorder %v2458, 8.507059e+37
      %v2460 = vand.u32 %v2207, 2147483648
      %v2461 = vor.u32 1.1754944e-38, %v2460
      %v2462 = vsel %vm2459, %v2461, %v2457
      %v2463 = vmul.f32 1.0, %v2462
      %v2464 = vrcp.pop %v2208
      %v2465 = vmul.f32 %v2208, %v2464
      %v2466 = vsub.f32 1.0, %v2465
      %v2467 = vmul.f32 %v2464, %v2466
      %v2468 = vadd.f32 %v2464, %v2467
      %vm2469 = vweird.f32 %v2208
      %vm2470 = vweird.f32 %v2464
      %vm2471 = vmor %vm2469, %vm2470
      %v2472 = vsel %vm2471, %v2464, %v2468
      %v2473 = vand.u32 2147483647, %v2208
      %vm2474 = vcmp.eq.f32.partialorder %v2473, 8.507059e+37
      %v2475 = vand.u32 %v2208, 2147483648
      %v2476 = vor.u32 1.1754944e-38, %v2475
      %v2477 = vsel %vm2474, %v2476, %v2472
      %v2478 = vmul.f32 1.0, %v2477
      %v2479 = vrcp.pop %v2209
      %v2480 = vmul.f32 %v2209, %v2479
      %v2481 = vsub.f32 1.0, %v2480
      %v2482 = vmul.f32 %v2479, %v2481
      %v2483 = vadd.f32 %v2479, %v2482
      %vm2484 = vweird.f32 %v2209
      %vm2485 = vweird.f32 %v2479
      %vm2486 = vmor %vm2484, %vm2485
      %v2487 = vsel %vm2486, %v2479, %v2483
      %v2488 = vand.u32 2147483647, %v2209
      %vm2489 = vcmp.eq.f32.partialorder %v2488, 8.507059e+37
      %v2490 = vand.u32 %v2209, 2147483648
      %v2491 = vor.u32 1.1754944e-38, %v2490
      %v2492 = vsel %vm2489, %v2491, %v2487
      %v2493 = vmul.f32 1.0, %v2492
      %v2494 = vrcp.pop %v2210
      %v2495 = vmul.f32 %v2210, %v2494
      %v2496 = vsub.f32 1.0, %v2495
      %v2497 = vmul.f32 %v2494, %v2496
      %v2498 = vadd.f32 %v2494, %v2497
      %vm2499 = vweird.f32 %v2210
      %vm2500 = vweird.f32 %v2494
      %vm2501 = vmor %vm2499, %vm2500
      %v2502 = vsel %vm2501, %v2494, %v2498
      %v2503 = vand.u32 2147483647, %v2210
      %vm2504 = vcmp.eq.f32.partialorder %v2503, 8.507059e+37
      %v2505 = vand.u32 %v2210, 2147483648
      %v2506 = vor.u32 1.1754944e-38, %v2505
      %v2507 = vsel %vm2504, %v2506, %v2502
      %v2508 = vmul.f32 1.0, %v2507
      %v2509 = vrcp.pop %v2211
      %v2510 = vmul.f32 %v2211, %v2509
      %v2511 = vsub.f32 1.0, %v2510
      %v2512 = vmul.f32 %v2509, %v2511
      %v2513 = vadd.f32 %v2509, %v2512
      %vm2514 = vweird.f32 %v2211
      %vm2515 = vweird.f32 %v2509
      %vm2516 = vmor %vm2514, %vm2515
      %v2517 = vsel %vm2516, %v2509, %v2513
      %v2518 = vand.u32 2147483647, %v2211
      %vm2519 = vcmp.eq.f32.partialorder %v2518, 8.507059e+37
      %v2520 = vand.u32 %v2211, 2147483648
      %v2521 = vor.u32 1.1754944e-38, %v2520
      %v2522 = vsel %vm2519, %v2521, %v2517
      %v2523 = vmul.f32 1.0, %v2522
      %v2524 = vrcp.pop %v2212
      %v2525 = vmul.f32 %v2212, %v2524
      %v2526 = vsub.f32 1.0, %v2525
      %v2527 = vmul.f32 %v2524, %v2526
      %v2528 = vadd.f32 %v2524, %v2527
      %vm2529 = vweird.f32 %v2212
      %vm2530 = vweird.f32 %v2524
      %vm2531 = vmor %vm2529, %vm2530
      %v2532 = vsel %vm2531, %v2524, %v2528
      %v2533 = vand.u32 2147483647, %v2212
      %vm2534 = vcmp.eq.f32.partialorder %v2533, 8.507059e+37
      %v2535 = vand.u32 %v2212, 2147483648
      %v2536 = vor.u32 1.1754944e-38, %v2535
      %v2537 = vsel %vm2534, %v2536, %v2532
      %v2538 = vmul.f32 1.0, %v2537
      %v2539 = vrcp.pop %v2213
      %v2540 = vmul.f32 %v2213, %v2539
      %v2541 = vsub.f32 1.0, %v2540
      %v2542 = vmul.f32 %v2539, %v2541
      %v2543 = vadd.f32 %v2539, %v2542
      %vm2544 = vweird.f32 %v2213
      %vm2545 = vweird.f32 %v2539
      %vm2546 = vmor %vm2544, %vm2545
      %v2547 = vsel %vm2546, %v2539, %v2543
      %v2548 = vand.u32 2147483647, %v2213
      %vm2549 = vcmp.eq.f32.partialorder %v2548, 8.507059e+37
      %v2550 = vand.u32 %v2213, 2147483648
      %v2551 = vor.u32 1.1754944e-38, %v2550
      %v2552 = vsel %vm2549, %v2551, %v2547
      %v2553 = vmul.f32 1.0, %v2552
      %v2554 = vrcp.pop %v2214
      %v2555 = vmul.f32 %v2214, %v2554
      %v2556 = vsub.f32 1.0, %v2555
      %v2557 = vmul.f32 %v2554, %v2556
      %v2558 = vadd.f32 %v2554, %v2557
      %vm2559 = vweird.f32 %v2214
      %vm2560 = vweird.f32 %v2554
      %vm2561 = vmor %vm2559, %vm2560
      %v2562 = vsel %vm2561, %v2554, %v2558
      %v2563 = vand.u32 2147483647, %v2214
      %vm2564 = vcmp.eq.f32.partialorder %v2563, 8.507059e+37
      %v2565 = vand.u32 %v2214, 2147483648
      %v2566 = vor.u32 1.1754944e-38, %v2565
      %v2567 = vsel %vm2564, %v2566, %v2562
      %v2568 = vmul.f32 1.0, %v2567
      %v2569 = vrcp.pop %v2215
      %v2570 = vmul.f32 %v2215, %v2569
      %v2571 = vsub.f32 1.0, %v2570
      %v2572 = vmul.f32 %v2569, %v2571
      %v2573 = vadd.f32 %v2569, %v2572
      %vm2574 = vweird.f32 %v2215
      %vm2575 = vweird.f32 %v2569
      %vm2576 = vmor %vm2574, %vm2575
      %v2577 = vsel %vm2576, %v2569, %v2573
      %v2578 = vand.u32 2147483647, %v2215
      %vm2579 = vcmp.eq.f32.partialorder %v2578, 8.507059e+37
      %v2580 = vand.u32 %v2215, 2147483648
      %v2581 = vor.u32 1.1754944e-38, %v2580
      %v2582 = vsel %vm2579, %v2581, %v2577
      %v2583 = vmul.f32 1.0, %v2582
      %v2584 = vrcp.pop %v2216
      %v2585 = vmul.f32 %v2216, %v2584
      %v2586 = vsub.f32 1.0, %v2585
      %v2587 = vmul.f32 %v2584, %v2586
      %v2588 = vadd.f32 %v2584, %v2587
      %vm2589 = vweird.f32 %v2216
      %vm2590 = vweird.f32 %v2584
      %vm2591 = vmor %vm2589, %vm2590
      %v2592 = vsel %vm2591, %v2584, %v2588
      %v2593 = vand.u32 2147483647, %v2216
      %vm2594 = vcmp.eq.f32.partialorder %v2593, 8.507059e+37
      %v2595 = vand.u32 %v2216, 2147483648
      %v2596 = vor.u32 1.1754944e-38, %v2595
      %v2597 = vsel %vm2594, %v2596, %v2592
      %v2598 = vmul.f32 1.0, %v2597
      %v2599 = vrcp.pop %v2217
      %v2600 = vmul.f32 %v2217, %v2599
      %v2601 = vsub.f32 1.0, %v2600
      %v2602 = vmul.f32 %v2599, %v2601
      %v2603 = vadd.f32 %v2599, %v2602
      %vm2604 = vweird.f32 %v2217
      %vm2605 = vweird.f32 %v2599
      %vm2606 = vmor %vm2604, %vm2605
      %v2607 = vsel %vm2606, %v2599, %v2603
      %v2608 = vand.u32 2147483647, %v2217
      %vm2609 = vcmp.eq.f32.partialorder %v2608, 8.507059e+37
      %v2610 = vand.u32 %v2217, 2147483648
      %v2611 = vor.u32 1.1754944e-38, %v2610
      %v2612 = vsel %vm2609, %v2611, %v2607
      %v2613 = vmul.f32 1.0, %v2612
      %v2614 = vrcp.pop %v2218
      %v2615 = vmul.f32 %v2218, %v2614
      %v2616 = vsub.f32 1.0, %v2615
      %v2617 = vmul.f32 %v2614, %v2616
      %v2618 = vadd.f32 %v2614, %v2617
      %vm2619 = vweird.f32 %v2218
      %vm2620 = vweird.f32 %v2614
      %vm2621 = vmor %vm2619, %vm2620
      %v2622 = vsel %vm2621, %v2614, %v2618
      %v2623 = vand.u32 2147483647, %v2218
      %vm2624 = vcmp.eq.f32.partialorder %v2623, 8.507059e+37
      %v2625 = vand.u32 %v2218, 2147483648
      %v2626 = vor.u32 1.1754944e-38, %v2625
      %v2627 = vsel %vm2624, %v2626, %v2622
      %v2628 = vmul.f32 1.0, %v2627
      %v2629 = vrcp.pop %v2219
      %v2630 = vmul.f32 %v2219, %v2629
      %v2631 = vsub.f32 1.0, %v2630
      %v2632 = vmul.f32 %v2629, %v2631
      %v2633 = vadd.f32 %v2629, %v2632
      %vm2634 = vweird.f32 %v2219
      %vm2635 = vweird.f32 %v2629
      %vm2636 = vmor %vm2634, %vm2635
      %v2637 = vsel %vm2636, %v2629, %v2633
      %v2638 = vand.u32 2147483647, %v2219
      %vm2639 = vcmp.eq.f32.partialorder %v2638, 8.507059e+37
      %v2640 = vand.u32 %v2219, 2147483648
      %v2641 = vor.u32 1.1754944e-38, %v2640
      %v2642 = vsel %vm2639, %v2641, %v2637
      %v2643 = vmul.f32 1.0, %v2642
      %v2644 = vrcp.pop %v2220
      %v2645 = vmul.f32 %v2220, %v2644
      %v2646 = vsub.f32 1.0, %v2645
      %v2647 = vmul.f32 %v2644, %v2646
      %v2648 = vadd.f32 %v2644, %v2647
      %vm2649 = vweird.f32 %v2220
      %vm2650 = vweird.f32 %v2644
      %vm2651 = vmor %vm2649, %vm2650
      %v2652 = vsel %vm2651, %v2644, %v2648
      %v2653 = vand.u32 2147483647, %v2220
      %vm2654 = vcmp.eq.f32.partialorder %v2653, 8.507059e+37
      %v2655 = vand.u32 %v2220, 2147483648
      %v2656 = vor.u32 1.1754944e-38, %v2655
      %v2657 = vsel %vm2654, %v2656, %v2652
      %v2658 = vmul.f32 1.0, %v2657
      %v2659 = vrcp.pop %v2221
      %v2660 = vmul.f32 %v2221, %v2659
      %v2661 = vsub.f32 1.0, %v2660
      %v2662 = vmul.f32 %v2659, %v2661
      %v2663 = vadd.f32 %v2659, %v2662
      %vm2664 = vweird.f32 %v2221
      %vm2665 = vweird.f32 %v2659
      %vm2666 = vmor %vm2664, %vm2665
      %v2667 = vsel %vm2666, %v2659, %v2663
      %v2668 = vand.u32 2147483647, %v2221
      %vm2669 = vcmp.eq.f32.partialorder %v2668, 8.507059e+37
      %v2670 = vand.u32 %v2221, 2147483648
      %v2671 = vor.u32 1.1754944e-38, %v2670
      %v2672 = vsel %vm2669, %v2671, %v2667
      %v2673 = vmul.f32 1.0, %v2672
      %v2674 = vrcp.pop %v2222
      %v2675 = vmul.f32 %v2222, %v2674
      %v2676 = vsub.f32 1.0, %v2675
      %v2677 = vmul.f32 %v2674, %v2676
      %v2678 = vadd.f32 %v2674, %v2677
      %vm2679 = vweird.f32 %v2222
      %vm2680 = vweird.f32 %v2674
      %vm2681 = vmor %vm2679, %vm2680
      %v2682 = vsel %vm2681, %v2674, %v2678
      %v2683 = vand.u32 2147483647, %v2222
      %vm2684 = vcmp.eq.f32.partialorder %v2683, 8.507059e+37
      %v2685 = vand.u32 %v2222, 2147483648
      %v2686 = vor.u32 1.1754944e-38, %v2685
      %v2687 = vsel %vm2684, %v2686, %v2682
      %v2688 = vmul.f32 1.0, %v2687
      %v2689 = vrcp.pop %v2223
      %v2690 = vmul.f32 %v2223, %v2689
      %v2691 = vsub.f32 1.0, %v2690
      %v2692 = vmul.f32 %v2689, %v2691
      %v2693 = vadd.f32 %v2689, %v2692
      %vm2694 = vweird.f32 %v2223
      %vm2695 = vweird.f32 %v2689
      %vm2696 = vmor %vm2694, %vm2695
      %v2697 = vsel %vm2696, %v2689, %v2693
      %v2698 = vand.u32 2147483647, %v2223
      %vm2699 = vcmp.eq.f32.partialorder %v2698, 8.507059e+37
      %v2700 = vand.u32 %v2223, 2147483648
      %v2701 = vor.u32 1.1754944e-38, %v2700
      %v2702 = vsel %vm2699, %v2701, %v2697
      %v2703 = vmul.f32 1.0, %v2702
      %v2736 = vlaneseq
      %v2737 = vand.u32 %v2736, 127
      %v2738 = vperm.slane %v2238, %v2737
      %v2739 = vadd.s32 %v2737, 4294967288
      %v2740 = vperm.slane %v2253, %v2739
      %vm2741 = vcmask 130112
      %v2742 = vsel %vm2741, %v2740, %v2738
      %v2743 = vperm.slane %v2268, %v2737
      %v2744 = vperm.slane %v2283, %v2739
      %v2745 = vsel %vm2741, %v2744, %v2743
      %v2746 = vperm.slane %v2298, %v2737
      %v2747 = vperm.slane %v2313, %v2739
      %v2748 = vsel %vm2741, %v2747, %v2746
      %v2749 = vperm.slane %v2328, %v2737
      %v2750 = vperm.slane %v2343, %v2739
      %v2751 = vsel %vm2741, %v2750, %v2749
      %v2752 = vperm.slane %v2358, %v2737
      %v2753 = vperm.slane %v2373, %v2739
      %v2754 = vsel %vm2741, %v2753, %v2752
      %v2755 = vperm.slane %v2388, %v2737
      %v2756 = vperm.slane %v2403, %v2739
      %v2757 = vsel %vm2741, %v2756, %v2755
      %v2758 = vperm.slane %v2418, %v2737
      %v2759 = vperm.slane %v2433, %v2739
      %v2760 = vsel %vm2741, %v2759, %v2758
      %v2761 = vperm.slane %v2448, %v2737
      %v2762 = vperm.slane %v2463, %v2739
      %v2763 = vsel %vm2741, %v2762, %v2761
      %v2764 = vperm.slane %v2478, %v2737
      %v2765 = vperm.slane %v2493, %v2739
      %v2766 = vsel %vm2741, %v2765, %v2764
      %v2767 = vperm.slane %v2508, %v2737
      %v2768 = vperm.slane %v2523, %v2739
      %v2769 = vsel %vm2741, %v2768, %v2767
      %v2770 = vperm.slane %v2538, %v2737
      %v2771 = vperm.slane %v2553, %v2739
      %v2772 = vsel %vm2741, %v2771, %v2770
      %v2773 = vperm.slane %v2568, %v2737
      %v2774 = vperm.slane %v2583, %v2739
      %v2775 = vsel %vm2741, %v2774, %v2773
      %v2776 = vperm.slane %v2598, %v2737
      %v2777 = vperm.slane %v2613, %v2739
      %v2778 = vsel %vm2741, %v2777, %v2776
      %v2779 = vperm.slane %v2628, %v2737
      %v2780 = vperm.slane %v2643, %v2739
      %v2781 = vsel %vm2741, %v2780, %v2779
      %v2782 = vperm.slane %v2658, %v2737
      %v2783 = vperm.slane %v2673, %v2739
      %v2784 = vsel %vm2741, %v2783, %v2782
      %v2785 = vperm.slane %v2688, %v2737
      %v2786 = vperm.slane %v2703, %v2739
      %v2787 = vsel %vm2741, %v2786, %v2785
      %vm2788 = vcmask 1041409
      %v2789 = vsel %vm2788, %v2745, %v2742
      %vm2790 = vcmask 1042434
      %v2791 = vsel %vm2790, %v2748, %v2789
      %vm2792 = vcmask 1043459
      %v2793 = vsel %vm2792, %v2751, %v2791
      %vm2794 = vcmask 1044484
      %v2795 = vsel %vm2794, %v2754, %v2793
      %vm2796 = vcmask 1045509
      %v2797 = vsel %vm2796, %v2757, %v2795
      %vm2798 = vcmask 1046534
      %v2799 = vsel %vm2798, %v2760, %v2797
      %vm2800 = vcmask 1047559
      %v2801 = vsel %vm2800, %v2763, %v2799
      %v2802 = vsel %vm2788, %v2769, %v2766
      %v2803 = vsel %vm2790, %v2772, %v2802
      %v2804 = vsel %vm2792, %v2775, %v2803
      %v2805 = vsel %vm2794, %v2778, %v2804
      %v2806 = vsel %vm2796, %v2781, %v2805
      %v2807 = vsel %vm2798, %v2784, %v2806
      %v2808 = vsel %vm2800, %v2787, %v2807
      %vm2811 = vcmask 130048
      %2812 = vst.msk [vmem:[%s321] sm:$0xff] %vm2811, %v2801
      %2813 = vst.msk [vmem:[%s321 + $0x8] sm:$0xff] %vm2811, %v2808
      %s2814 = smul.u32 2, %s25
      %p2815 = scmp.lt.s32.totalorder %s24, 1
      %s2816 = scalar_select %p2815, %s24, 1
      %p2817 = scmp.lt.s32.totalorder %s2814, 1
      %s2818 = scalar_select %p2817, %s2814, 1
      %s2819 = smul.addr %s2816, 2
      %s2820 = sadd.s32 %s2818, %s2819
      %s2821 = smul.addr %s2820, 8
      %s2822 = scalar_lea.vmem %s7, %s2821
      // Predicated region
      $region49: #{discriminator_up_forward.1} parent=47 // pred_check
        %p2823 = pneg %p206
      $region50: #{discriminator_up_forward.1} parent=47 // pred_check_branch
        %2825 = sbr.rel (%p2823) target = $region52
      $region51: #{discriminator_up_forward.1} parent=47 // pred_region
        %s2826 = smul.u32 2, %s25
      $region52: #{discriminator_up_forward.1} parent=47 // pred_fallthru
        _
    $region48: #{discriminator_up_forward.1} parent=5 // pred_fallthru
      _
    %p2827 = scmp.le.s32.totalorder 2, %s15
    // Predicated region
    $region53: #{discriminator_up_forward.1} parent=5 // pred_check
      %p2828 = pneg %p2827
    $region54: #{discriminator_up_forward.1} parent=5 // pred_check_branch
      %2830 = sbr.rel (%p2828) target = $region56
    $region55: #{discriminator_up_forward.1} parent=5 // pred_region
      %s2831 = ssub.s32 %s15, 2
      // Predicated region
      $region57: #{discriminator_up_forward.1} parent=55 // pred_check
        %p2832 = pneg %p212
      $region58: #{discriminator_up_forward.1} parent=55 // pred_check_branch
        %2834 = sbr.rel (%p2832) target = $region60
      $region59: #{discriminator_up_forward.1} parent=55 // pred_region
        %s2835 = smul.u32 2, %s27
        %p2836 = scmp.lt.s32.totalorder %s26, 1
        %s2837 = scalar_select %p2836, %s26, 1
        %p2838 = scmp.lt.s32.totalorder %s2835, 1
        %s2839 = scalar_select %p2838, %s2835, 1
        %s2840 = smul.addr %s2837, 2
        %s2841 = sadd.s32 %s2839, %s2840
        %s2842 = smul.addr %s2841, 8
        %s2843 = scalar_lea.vmem %s7, %s2842
      $region60: #{discriminator_up_forward.1} parent=55 // pred_fallthru
        _
    $region56: #{discriminator_up_forward.1} parent=5 // pred_fallthru
      _
  $region6: #{discriminator_up_forward.1} parent=0 // loop_footer
    %s19 = sadd.s32 1, %s15
  $region7: #{discriminator_up_forward.1} parent=0 // loop_footer_branch
    %14 = sbr.rel target = $region3
  $region8: #{discriminator_up_forward.1} parent=0 // loop_exit
    _

</llo_original>
